<compile_context>
chip_gen: v5e
topology: v5e:2x2
jax: 0.10.0
libtpu: 0.0.40
codegen_flags: <defaults>
</compile_context>

<pallas_src>
import math
import functools

import jax
import jax.numpy as jnp
from jax.experimental import pallas as pl
from jax.experimental.pallas import tpu as pltpu

# ----------------------- model config (small, synthetic) -----------------------
CFG = dict(
    vocab=64,        # synthetic vocab (bert-base is 30522)
    max_pos=16,
    type_vocab=2,
    hidden=32,       # bert-base: 768
    heads=4,         # bert-base: 12
    intermediate=64, # bert-base: 3072
    layers=2,        # bert-base: 12
    labels=2,        # BertForSequenceClassification default num_labels
)
LN_EPS = 1e-12       # BERT layer-norm eps
LANE = 128           # lane-dense padding for the classifier / logits output


# ------------------------------- kernel helpers ---------------------------------

def _layernorm(x, g, b, eps):
    mean = jnp.mean(x, axis=-1, keepdims=True)
    var = jnp.mean(jnp.square(x - mean), axis=-1, keepdims=True)
    return (x - mean) * jax.lax.rsqrt(var + eps) * g + b


def _mhsa(q, k, v, batch, seq, num_heads, head_dim):
    """Multi-head self-attention on batch-folded rows.

    q, k, v: (B*S, H) f32.  Q is already pre-scaled by 1/sqrt(head_dim) (the
    scale was folded into the QKV weight in the wrapper).  Returns the
    attention context as (B*S, H) f32.
    """
    def to_heads(t):  # (B*S, H) f32 -> (B*nh, S, hd) bf16
        parts = [t[b * seq:(b + 1) * seq, h * head_dim:(h + 1) * head_dim]
                 for b in range(batch) for h in range(num_heads)]
        return jnp.stack(parts).astype(jnp.bfloat16)

    qh, kh, vh = to_heads(q), to_heads(k), to_heads(v)

    # scores: contract head_dim, batched over (batch*heads)  -> (B*nh, S, S)
    s = jax.lax.dot_general(qh, kh, (((2,), (2,)), ((0,), (0,))),
                            preferred_element_type=jnp.float32)
    s = s - jnp.max(s, axis=-1, keepdims=True)
    p = jnp.exp(s)
    p = p * pl.reciprocal(jnp.sum(p, axis=-1, keepdims=True), approx=True)

    # context: (B*nh, S, S) @ (B*nh, S, hd) -> (B*nh, S, hd)
    ctx = jax.lax.dot_general(p.astype(jnp.bfloat16), vh,
                              (((2,), (1,)), ((0,), (0,))),
                              preferred_element_type=jnp.float32)

    # back to batch-folded rows (B*S, H)
    rows = [jnp.concatenate([ctx[b * num_heads + h] for h in range(num_heads)],
                            axis=-1)
            for b in range(batch)]
    return jnp.concatenate(rows, axis=0)


# ------------------------------- fused Pallas kernel ----------------------------

def _bert_fwd_kernel(
    emb_ref,                               # (B*S, H)  f32  batch-folded embeddings
    emb_g_ref, emb_b_ref,                  # (1, H)    f32
    wqkv_ref, bqkv_ref,                    # (L, H, 3H) bf16, (L, 1, 3H) f32
    wo_ref, bo_ref,                        # (L, H, H)  bf16, (L, 1, H)  f32
    ln1_g_ref, ln1_b_ref,                  # (L, 1, H)  f32
    wi_ref, bi_ref,                        # (L, H, I)  bf16, (L, 1, I)  f32
    wo2_ref, bo2_ref,                      # (L, I, H)  bf16, (L, 1, H)  f32
    ln2_g_ref, ln2_b_ref,                  # (L, 1, H)  f32
    pool_w_ref, pool_b_ref,                # (H, H) bf16, (1, H) f32
    cls_w_ref, cls_b_ref,                  # (H, LANE) bf16, (1, LANE) f32 (zero padded)
    out_ref,                               # (B, LANE) f32 — lane-dense logits slab
    *, batch, seq, num_layers, num_heads, head_dim, eps):
    H = num_heads * head_dim

    # --- embedding LayerNorm (no residual; dropout = identity in eval mode)
    x = _layernorm(emb_ref[...], emb_g_ref[...], emb_b_ref[...], eps)     # (B*S, H)

    # --- transformer encoder layers (num_layers is small & static -> unrolled)
    for l in range(num_layers):
        # fused QKV projection: single (B*S,H)x(H,3H) bf16 MXU matmul, f32 acc
        qkv = jnp.dot(x.astype(jnp.bfloat16), wqkv_ref[l],
                      preferred_element_type=jnp.float32) + bqkv_ref[l]   # (B*S,3H)
        ctx = _mhsa(qkv[:, 0:H], qkv[:, H:2 * H], qkv[:, 2 * H:3 * H],
                    batch, seq, num_heads, head_dim)                      # (B*S, H)

        # attention output projection + residual + LN1 (fused epilogue)
        attn = jnp.dot(ctx.astype(jnp.bfloat16), wo_ref[l],
                       preferred_element_type=jnp.float32) + bo_ref[l]
        x = _layernorm(attn + x, ln1_g_ref[l], ln1_b_ref[l], eps)

        # FFN (gelu) + residual + LN2 (fused epilogue)
        # TODO(synk): HF BERT uses erf-GELU; tanh approximation kept for clean lowering.
        inter = jax.nn.gelu(
            jnp.dot(x.astype(jnp.bfloat16), wi_ref[l],
                    preferred_element_type=jnp.float32) + bi_ref[l],
            approximate=True)
        ffn = jnp.dot(inter.astype(jnp.bfloat16), wo2_ref[l],
                      preferred_element_type=jnp.float32) + bo2_ref[l]
        x = _layernorm(ffn + x, ln2_g_ref[l], ln2_b_ref[l], eps)

    # --- pooler (CLS token of every batch element -> dense + tanh) + classifier.
    cls_rows = jnp.concatenate([x[b * seq:b * seq + 1, :] for b in range(batch)],
                               axis=0)                                     # (B, H)
    pooled = jnp.tanh(
        jnp.dot(cls_rows.astype(jnp.bfloat16), pool_w_ref[...],
                preferred_element_type=jnp.float32) + pool_b_ref[...])     # (B, H)
    out_ref[...] = (jnp.dot(pooled.astype(jnp.bfloat16), cls_w_ref[...],
                            preferred_element_type=jnp.float32)
                    + cls_b_ref[...])                                      # (B, LANE)


# ---------------------------- parameters (synthetic) ----------------------------

def init_params(key):
    H, I, NL = CFG["hidden"], CFG["intermediate"], CFG["labels"]
    std = 0.02

    def nrm(k, shape):
        return std * jax.random.normal(k, shape, dtype=jnp.float32)

    keys = iter(jax.random.split(key, 8 + 8 * CFG["layers"]))
    params = dict(
        word_emb=nrm(next(keys), (CFG["vocab"], H)),
        pos_emb=nrm(next(keys), (CFG["max_pos"], H)),
        type_emb=nrm(next(keys), (CFG["type_vocab"], H)),
        emb_ln_g=jnp.ones((H,), jnp.float32),
        emb_ln_b=jnp.zeros((H,), jnp.float32),
        pool_w=nrm(next(keys), (H, H)),
        pool_b=jnp.zeros((H,), jnp.float32),
        cls_w=nrm(next(keys), (H, NL)),
        cls_b=jnp.zeros((NL,), jnp.float32),
        layers=[],
    )
    for _ in range(CFG["layers"]):
        params["layers"].append(dict(
            wq=nrm(next(keys), (H, H)), bq=jnp.zeros((H,), jnp.float32),
            wk=nrm(next(keys), (H, H)), bk=jnp.zeros((H,), jnp.float32),
            wv=nrm(next(keys), (H, H)), bv=jnp.zeros((H,), jnp.float32),
            wo=nrm(next(keys), (H, H)), bo=jnp.zeros((H,), jnp.float32),
            ln1_g=jnp.ones((H,), jnp.float32), ln1_b=jnp.zeros((H,), jnp.float32),
            wi=nrm(next(keys), (H, I)), bi=jnp.zeros((I,), jnp.float32),
            wo2=nrm(next(keys), (I, H)), bo2=jnp.zeros((H,), jnp.float32),
            ln2_g=jnp.ones((H,), jnp.float32), ln2_b=jnp.zeros((H,), jnp.float32),
        ))
    return params


# --------------------------------- forward pass ---------------------------------

def bert_for_retrieval(params, input_ids):
    """probs = softmax(BertForSequenceClassification(input_ids).logits, dim=1)."""
    B, S = input_ids.shape
    H, nh = CFG["hidden"], CFG["heads"]
    I, L, NL = CFG["intermediate"], CFG["layers"], CFG["labels"]
    hd = H // nh
    assert NL <= LANE
    scale = 1.0 / math.sqrt(hd)

    # --- embedding gather + add is plain-JAX glue; fold batch into rows here.
    emb = (jnp.take(params["word_emb"], input_ids, axis=0)
           + params["pos_emb"][None, :S, :]
           + params["type_emb"][0][None, None, :]).astype(jnp.float32)     # (B, S, H)
    emb = emb.reshape(B * S, H)                                            # (B*S, H)

    # --- stack per-layer weights; matmul operands in bf16, everything else f32.
    lyrs = params["layers"]
    stk = lambda name: jnp.stack([l[name] for l in lyrs])
    # fused QKV with 1/sqrt(head_dim) folded into the Q columns + Q bias (free)
    wqkv = jnp.stack([jnp.concatenate([l["wq"] * scale, l["wk"], l["wv"]], axis=1)
                      for l in lyrs]).astype(jnp.bfloat16)                 # (L, H, 3H)
    bqkv = jnp.stack([jnp.concatenate([l["bq"] * scale, l["bk"], l["bv"]])[None, :]
                      for l in lyrs])                                      # (L, 1, 3H)
    wo, bo = stk("wo").astype(jnp.bfloat16), stk("bo")[:, None, :]
    ln1_g, ln1_b = stk("ln1_g")[:, None, :], stk("ln1_b")[:, None, :]
    wi, bi = stk("wi").astype(jnp.bfloat16), stk("bi")[:, None, :]
    wo2, bo2 = stk("wo2").astype(jnp.bfloat16), stk("bo2")[:, None, :]
    ln2_g, ln2_b = stk("ln2_g")[:, None, :], stk("ln2_b")[:, None, :]
    pool_w = params["pool_w"].astype(jnp.bfloat16)
    pool_b = params["pool_b"].reshape(1, H)
    # classifier zero-padded to a lane-dense 128-wide output slab
    cls_w = jnp.zeros((H, LANE), jnp.float32).at[:, :NL].set(
        params["cls_w"]).astype(jnp.bfloat16)
    cls_b = jnp.zeros((1, LANE), jnp.float32).at[:, :NL].set(
        params["cls_b"][None, :])

    vmem = lambda: pl.BlockSpec(memory_space=pltpu.MemorySpace.VMEM)

    # TODO(synk): at real bert-base sizes, add a layer grid axis ("arbitrary") to
    # stream per-layer weights instead of keeping the whole stack VMEM-resident,
    # and on v7x use pltpu.CORE_PARALLEL over a batch axis when B is large.
    logits_pad = pl.pallas_call(
        functools.partial(_bert_fwd_kernel, batch=B, seq=S, num_layers=L,
                          num_heads=nh, head_dim=hd, eps=LN_EPS),
        out_shape=jax.ShapeDtypeStruct((B, LANE), jnp.float32),
        in_specs=[vmem() for _ in range(19)],
        out_specs=vmem(),
    )(emb,
      params["emb_ln_g"].reshape(1, H), params["emb_ln_b"].reshape(1, H),
      wqkv, bqkv, wo, bo, ln1_g, ln1_b, wi, bi, wo2, bo2, ln2_g, ln2_b,
      pool_w, pool_b, cls_w, cls_b)

    # trivial NL-wide softmax in the wrapper (exact; output rows sum to 1)
    logits = logits_pad[:, :NL]
    return jax.nn.softmax(logits, axis=1)


# ------------------------------------- main --------------------------------------

if __name__ == "__main__":
    key = jax.random.PRNGKey(0)
    pkey, ikey = jax.random.split(key)

    params = init_params(pkey)
    batch, seq = 2, 8
    input_ids = jax.random.randint(ikey, (batch, seq), 0, CFG["vocab"],
                                   dtype=jnp.int32)

    probs = bert_for_retrieval(params, input_ids)
    probs = jax.block_until_ready(probs)

    assert probs.shape == (batch, CFG["labels"])
    assert bool(jnp.all(jnp.isfinite(probs)))
    # rows of a softmax must sum to 1
    assert bool(jnp.allclose(jnp.sum(probs, axis=1), 1.0, atol=1e-5))
    print("KERNEL_OK")
</pallas_src>

<mosaic_0001>
module attributes {stable_mosaic.version = 11 : i64} {
  func.func @_bert_fwd_kernel(%arg0: memref<16x32xf32, #tpu.memory_space<vmem>>, %arg1: memref<1x32xf32, #tpu.memory_space<vmem>>, %arg2: memref<1x32xf32, #tpu.memory_space<vmem>>, %arg3: memref<2x32x96xbf16, #tpu.memory_space<vmem>>, %arg4: memref<2x1x96xf32, #tpu.memory_space<vmem>>, %arg5: memref<2x32x32xbf16, #tpu.memory_space<vmem>>, %arg6: memref<2x1x32xf32, #tpu.memory_space<vmem>>, %arg7: memref<2x1x32xf32, #tpu.memory_space<vmem>>, %arg8: memref<2x1x32xf32, #tpu.memory_space<vmem>>, %arg9: memref<2x32x64xbf16, #tpu.memory_space<vmem>>, %arg10: memref<2x1x64xf32, #tpu.memory_space<vmem>>, %arg11: memref<2x64x32xbf16, #tpu.memory_space<vmem>>, %arg12: memref<2x1x32xf32, #tpu.memory_space<vmem>>, %arg13: memref<2x1x32xf32, #tpu.memory_space<vmem>>, %arg14: memref<2x1x32xf32, #tpu.memory_space<vmem>>, %arg15: memref<32x32xbf16, #tpu.memory_space<vmem>>, %arg16: memref<1x32xf32, #tpu.memory_space<vmem>>, %arg17: memref<32x128xbf16, #tpu.memory_space<vmem>>, %arg18: memref<1x128xf32, #tpu.memory_space<vmem>>, %arg19: memref<2x128xf32, #tpu.memory_space<vmem>>) attributes {dimension_semantics = [], scalar_prefetch = 0 : i64, scratch_operands = 0 : i64, tpu.core_type = #tpu.core_type<tc>} {
    %c0 = arith.constant 0 : index
    %c0_0 = arith.constant 0 : index
    %0 = vector.load %arg0[%c0, %c0_0] : memref<16x32xf32, #tpu.memory_space<vmem>>, vector<16x32xf32>
    %c0_1 = arith.constant 0 : index
    %c0_2 = arith.constant 0 : index
    %1 = vector.load %arg1[%c0_1, %c0_2] : memref<1x32xf32, #tpu.memory_space<vmem>>, vector<1x32xf32>
    %c0_3 = arith.constant 0 : index
    %c0_4 = arith.constant 0 : index
    %2 = vector.load %arg2[%c0_3, %c0_4] : memref<1x32xf32, #tpu.memory_space<vmem>>, vector<1x32xf32>
    %cst = arith.constant dense<0.000000e+00> : vector<16xf32>
    %3 = vector.multi_reduction <add>, %0, %cst [1] : vector<16x32xf32> to vector<16xf32>
    %4 = vector.shape_cast %3 : vector<16xf32> to vector<16x1xf32>
    %cst_5 = arith.constant 3.200000e+01 : f32
    %5 = vector.broadcast %cst_5 : f32 to vector<16x1xf32>
    %6 = arith.divf %4, %5 : vector<16x1xf32>
    %7 = vector.broadcast %6 : vector<16x1xf32> to vector<16x32xf32>
    %8 = arith.subf %0, %7 : vector<16x32xf32>
    %9 = arith.mulf %8, %8 : vector<16x32xf32>
    %cst_6 = arith.constant dense<0.000000e+00> : vector<16xf32>
    %10 = vector.multi_reduction <add>, %9, %cst_6 [1] : vector<16x32xf32> to vector<16xf32>
    %11 = vector.shape_cast %10 : vector<16xf32> to vector<16x1xf32>
    %cst_7 = arith.constant 3.200000e+01 : f32
    %12 = vector.broadcast %cst_7 : f32 to vector<16x1xf32>
    %13 = arith.divf %11, %12 : vector<16x1xf32>
    %14 = vector.broadcast %6 : vector<16x1xf32> to vector<16x32xf32>
    %15 = arith.subf %0, %14 : vector<16x32xf32>
    %cst_8 = arith.constant 9.99999996E-13 : f32
    %16 = vector.broadcast %cst_8 : f32 to vector<16x1xf32>
    %17 = arith.addf %13, %16 : vector<16x1xf32>
    %18 = math.rsqrt %17 : vector<16x1xf32>
    %19 = vector.broadcast %18 : vector<16x1xf32> to vector<16x32xf32>
    %20 = arith.mulf %15, %19 : vector<16x32xf32>
    %21 = vector.broadcast %1 : vector<1x32xf32> to vector<16x32xf32>
    %22 = arith.mulf %20, %21 : vector<16x32xf32>
    %23 = vector.broadcast %2 : vector<1x32xf32> to vector<16x32xf32>
    %24 = arith.addf %22, %23 : vector<16x32xf32>
    %25 = arith.truncf %24 : vector<16x32xf32> to vector<16x32xbf16>
    %c0_9 = arith.constant 0 : index
    %c0_10 = arith.constant 0 : index
    %c0_11 = arith.constant 0 : index
    %26 = vector.load %arg3[%c0_9, %c0_10, %c0_11] : memref<2x32x96xbf16, #tpu.memory_space<vmem>>, vector<1x32x96xbf16>
    %27 = vector.shape_cast %26 : vector<1x32x96xbf16> to vector<32x96xbf16>
    %cst_12 = arith.constant dense<0.000000e+00> : vector<16x96xf32>
    %28 = tpu.matmul %25, %27, %cst_12 {dimension_numbers = #tpu.dot_dimension_numbers<[1], [0], [0], [1], [0, 0, 1, 1], [], []>} : vector<16x32xbf16>, vector<32x96xbf16>, vector<16x96xf32> -> vector<16x96xf32>
    %c0_13 = arith.constant 0 : index
    %c0_14 = arith.constant 0 : index
    %c0_15 = arith.constant 0 : index
    %29 = vector.load %arg4[%c0_13, %c0_14, %c0_15] : memref<2x1x96xf32, #tpu.memory_space<vmem>>, vector<1x1x96xf32>
    %30 = vector.shape_cast %29 : vector<1x1x96xf32> to vector<1x96xf32>
    %31 = vector.broadcast %30 : vector<1x96xf32> to vector<16x96xf32>
    %32 = arith.addf %28, %31 : vector<16x96xf32>
    %33 = vector.extract_strided_slice %32 {offsets = [0, 0], sizes = [16, 32], strides = [1, 1]} : vector<16x96xf32> to vector<16x32xf32>
    %34 = vector.extract_strided_slice %32 {offsets = [0, 32], sizes = [16, 32], strides = [1, 1]} : vector<16x96xf32> to vector<16x32xf32>
    %35 = vector.extract_strided_slice %32 {offsets = [0, 64], sizes = [16, 32], strides = [1, 1]} : vector<16x96xf32> to vector<16x32xf32>
    %36 = vector.extract_strided_slice %33 {offsets = [0, 0], sizes = [8, 8], strides = [1, 1]} : vector<16x32xf32> to vector<8x8xf32>
    %37 = vector.extract_strided_slice %33 {offsets = [0, 8], sizes = [8, 8], strides = [1, 1]} : vector<16x32xf32> to vector<8x8xf32>
    %38 = vector.extract_strided_slice %33 {offsets = [0, 16], sizes = [8, 8], strides = [1, 1]} : vector<16x32xf32> to vector<8x8xf32>
    %39 = vector.extract_strided_slice %33 {offsets = [0, 24], sizes = [8, 8], strides = [1, 1]} : vector<16x32xf32> to vector<8x8xf32>
    %40 = vector.extract_strided_slice %33 {offsets = [8, 0], sizes = [8, 8], strides = [1, 1]} : vector<16x32xf32> to vector<8x8xf32>
    %41 = vector.extract_strided_slice %33 {offsets = [8, 8], sizes = [8, 8], strides = [1, 1]} : vector<16x32xf32> to vector<8x8xf32>
    %42 = vector.extract_strided_slice %33 {offsets = [8, 16], sizes = [8, 8], strides = [1, 1]} : vector<16x32xf32> to vector<8x8xf32>
    %43 = vector.extract_strided_slice %33 {offsets = [8, 24], sizes = [8, 8], strides = [1, 1]} : vector<16x32xf32> to vector<8x8xf32>
    %44 = vector.shape_cast %36 : vector<8x8xf32> to vector<1x8x8xf32>
    %45 = vector.shape_cast %37 : vector<8x8xf32> to vector<1x8x8xf32>
    %46 = vector.shape_cast %38 : vector<8x8xf32> to vector<1x8x8xf32>
    %47 = vector.shape_cast %39 : vector<8x8xf32> to vector<1x8x8xf32>
    %48 = vector.shape_cast %40 : vector<8x8xf32> to vector<1x8x8xf32>
    %49 = vector.shape_cast %41 : vector<8x8xf32> to vector<1x8x8xf32>
    %50 = vector.shape_cast %42 : vector<8x8xf32> to vector<1x8x8xf32>
    %51 = vector.shape_cast %43 : vector<8x8xf32> to vector<1x8x8xf32>
    %52 = tpu.concatenate %44, %45, %46, %47, %48, %49, %50, %51 in 0 : vector<1x8x8xf32>, vector<1x8x8xf32>, vector<1x8x8xf32>, vector<1x8x8xf32>, vector<1x8x8xf32>, vector<1x8x8xf32>, vector<1x8x8xf32>, vector<1x8x8xf32> -> vector<8x8x8xf32>
    %53 = arith.truncf %52 : vector<8x8x8xf32> to vector<8x8x8xbf16>
    %54 = vector.extract_strided_slice %34 {offsets = [0, 0], sizes = [8, 8], strides = [1, 1]} : vector<16x32xf32> to vector<8x8xf32>
    %55 = vector.extract_strided_slice %34 {offsets = [0, 8], sizes = [8, 8], strides = [1, 1]} : vector<16x32xf32> to vector<8x8xf32>
    %56 = vector.extract_strided_slice %34 {offsets = [0, 16], sizes = [8, 8], strides = [1, 1]} : vector<16x32xf32> to vector<8x8xf32>
    %57 = vector.extract_strided_slice %34 {offsets = [0, 24], sizes = [8, 8], strides = [1, 1]} : vector<16x32xf32> to vector<8x8xf32>
    %58 = vector.extract_strided_slice %34 {offsets = [8, 0], sizes = [8, 8], strides = [1, 1]} : vector<16x32xf32> to vector<8x8xf32>
    %59 = vector.extract_strided_slice %34 {offsets = [8, 8], sizes = [8, 8], strides = [1, 1]} : vector<16x32xf32> to vector<8x8xf32>
    %60 = vector.extract_strided_slice %34 {offsets = [8, 16], sizes = [8, 8], strides = [1, 1]} : vector<16x32xf32> to vector<8x8xf32>
    %61 = vector.extract_strided_slice %34 {offsets = [8, 24], sizes = [8, 8], strides = [1, 1]} : vector<16x32xf32> to vector<8x8xf32>
    %62 = vector.shape_cast %54 : vector<8x8xf32> to vector<1x8x8xf32>
    %63 = vector.shape_cast %55 : vector<8x8xf32> to vector<1x8x8xf32>
    %64 = vector.shape_cast %56 : vector<8x8xf32> to vector<1x8x8xf32>
    %65 = vector.shape_cast %57 : vector<8x8xf32> to vector<1x8x8xf32>
    %66 = vector.shape_cast %58 : vector<8x8xf32> to vector<1x8x8xf32>
    %67 = vector.shape_cast %59 : vector<8x8xf32> to vector<1x8x8xf32>
    %68 = vector.shape_cast %60 : vector<8x8xf32> to vector<1x8x8xf32>
    %69 = vector.shape_cast %61 : vector<8x8xf32> to vector<1x8x8xf32>
    %70 = tpu.concatenate %62, %63, %64, %65, %66, %67, %68, %69 in 0 : vector<1x8x8xf32>, vector<1x8x8xf32>, vector<1x8x8xf32>, vector<1x8x8xf32>, vector<1x8x8xf32>, vector<1x8x8xf32>, vector<1x8x8xf32>, vector<1x8x8xf32> -> vector<8x8x8xf32>
    %71 = arith.truncf %70 : vector<8x8x8xf32> to vector<8x8x8xbf16>
    %72 = vector.extract_strided_slice %35 {offsets = [0, 0], sizes = [8, 8], strides = [1, 1]} : vector<16x32xf32> to vector<8x8xf32>
    %73 = vector.extract_strided_slice %35 {offsets = [0, 8], sizes = [8, 8], strides = [1, 1]} : vector<16x32xf32> to vector<8x8xf32>
    %74 = vector.extract_strided_slice %35 {offsets = [0, 16], sizes = [8, 8], strides = [1, 1]} : vector<16x32xf32> to vector<8x8xf32>
    %75 = vector.extract_strided_slice %35 {offsets = [0, 24], sizes = [8, 8], strides = [1, 1]} : vector<16x32xf32> to vector<8x8xf32>
    %76 = vector.extract_strided_slice %35 {offsets = [8, 0], sizes = [8, 8], strides = [1, 1]} : vector<16x32xf32> to vector<8x8xf32>
    %77 = vector.extract_strided_slice %35 {offsets = [8, 8], sizes = [8, 8], strides = [1, 1]} : vector<16x32xf32> to vector<8x8xf32>
    %78 = vector.extract_strided_slice %35 {offsets = [8, 16], sizes = [8, 8], strides = [1, 1]} : vector<16x32xf32> to vector<8x8xf32>
    %79 = vector.extract_strided_slice %35 {offsets = [8, 24], sizes = [8, 8], strides = [1, 1]} : vector<16x32xf32> to vector<8x8xf32>
    %80 = vector.shape_cast %72 : vector<8x8xf32> to vector<1x8x8xf32>
    %81 = vector.shape_cast %73 : vector<8x8xf32> to vector<1x8x8xf32>
    %82 = vector.shape_cast %74 : vector<8x8xf32> to vector<1x8x8xf32>
    %83 = vector.shape_cast %75 : vector<8x8xf32> to vector<1x8x8xf32>
    %84 = vector.shape_cast %76 : vector<8x8xf32> to vector<1x8x8xf32>
    %85 = vector.shape_cast %77 : vector<8x8xf32> to vector<1x8x8xf32>
    %86 = vector.shape_cast %78 : vector<8x8xf32> to vector<1x8x8xf32>
    %87 = vector.shape_cast %79 : vector<8x8xf32> to vector<1x8x8xf32>
    %88 = tpu.concatenate %80, %81, %82, %83, %84, %85, %86, %87 in 0 : vector<1x8x8xf32>, vector<1x8x8xf32>, vector<1x8x8xf32>, vector<1x8x8xf32>, vector<1x8x8xf32>, vector<1x8x8xf32>, vector<1x8x8xf32>, vector<1x8x8xf32> -> vector<8x8x8xf32>
    %89 = arith.truncf %88 : vector<8x8x8xf32> to vector<8x8x8xbf16>
    %cst_16 = arith.constant dense<0.000000e+00> : vector<8x8x8xf32>
    %90 = tpu.matmul %53, %71, %cst_16 {dimension_numbers = #tpu.dot_dimension_numbers<[2], [2], [1], [1], [0, 0, 0, 1, 1, 1], [0], [0]>} : vector<8x8x8xbf16>, vector<8x8x8xbf16>, vector<8x8x8xf32> -> vector<8x8x8xf32>
    %cst_17 = arith.constant dense<0xFF800000> : vector<8x8xf32>
    %91 = vector.multi_reduction <maximumf>, %90, %cst_17 [2] : vector<8x8x8xf32> to vector<8x8xf32>
    %92 = vector.shape_cast %91 : vector<8x8xf32> to vector<8x8x1xf32>
    %93 = vector.broadcast %92 : vector<8x8x1xf32> to vector<8x8x8xf32>
    %94 = arith.subf %90, %93 : vector<8x8x8xf32>
    %95 = math.exp %94 : vector<8x8x8xf32>
    %cst_18 = arith.constant dense<0.000000e+00> : vector<8x8xf32>
    %96 = vector.multi_reduction <add>, %95, %cst_18 [2] : vector<8x8x8xf32> to vector<8x8xf32>
    %97 = vector.shape_cast %96 : vector<8x8xf32> to vector<8x8x1xf32>
    %98 = tpu.reciprocal %97 {approx = true} : vector<8x8x1xf32> -> vector<8x8x1xf32>
    %99 = vector.broadcast %98 : vector<8x8x1xf32> to vector<8x8x8xf32>
    %100 = arith.mulf %95, %99 : vector<8x8x8xf32>
    %101 = arith.truncf %100 : vector<8x8x8xf32> to vector<8x8x8xbf16>
    %cst_19 = arith.constant dense<0.000000e+00> : vector<8x8x8xf32>
    %102 = tpu.matmul %101, %89, %cst_19 {dimension_numbers = #tpu.dot_dimension_numbers<[2], [1], [1], [2], [0, 0, 0, 1, 1, 2], [0], [0]>} : vector<8x8x8xbf16>, vector<8x8x8xbf16>, vector<8x8x8xf32> -> vector<8x8x8xf32>
    %103 = vector.extract_strided_slice %102 {offsets = [0, 0, 0], sizes = [1, 8, 8], strides = [1, 1, 1]} : vector<8x8x8xf32> to vector<1x8x8xf32>
    %104 = vector.shape_cast %103 : vector<1x8x8xf32> to vector<8x8xf32>
    %105 = vector.extract_strided_slice %102 {offsets = [1, 0, 0], sizes = [1, 8, 8], strides = [1, 1, 1]} : vector<8x8x8xf32> to vector<1x8x8xf32>
    %106 = vector.shape_cast %105 : vector<1x8x8xf32> to vector<8x8xf32>
    %107 = vector.extract_strided_slice %102 {offsets = [2, 0, 0], sizes = [1, 8, 8], strides = [1, 1, 1]} : vector<8x8x8xf32> to vector<1x8x8xf32>
    %108 = vector.shape_cast %107 : vector<1x8x8xf32> to vector<8x8xf32>
    %109 = vector.extract_strided_slice %102 {offsets = [3, 0, 0], sizes = [1, 8, 8], strides = [1, 1, 1]} : vector<8x8x8xf32> to vector<1x8x8xf32>
    %110 = vector.shape_cast %109 : vector<1x8x8xf32> to vector<8x8xf32>
    %111 = tpu.concatenate %104, %106, %108, %110 in 1 : vector<8x8xf32>, vector<8x8xf32>, vector<8x8xf32>, vector<8x8xf32> -> vector<8x32xf32>
    %112 = vector.extract_strided_slice %102 {offsets = [4, 0, 0], sizes = [1, 8, 8], strides = [1, 1, 1]} : vector<8x8x8xf32> to vector<1x8x8xf32>
    %113 = vector.shape_cast %112 : vector<1x8x8xf32> to vector<8x8xf32>
    %114 = vector.extract_strided_slice %102 {offsets = [5, 0, 0], sizes = [1, 8, 8], strides = [1, 1, 1]} : vector<8x8x8xf32> to vector<1x8x8xf32>
    %115 = vector.shape_cast %114 : vector<1x8x8xf32> to vector<8x8xf32>
    %116 = vector.extract_strided_slice %102 {offsets = [6, 0, 0], sizes = [1, 8, 8], strides = [1, 1, 1]} : vector<8x8x8xf32> to vector<1x8x8xf32>
    %117 = vector.shape_cast %116 : vector<1x8x8xf32> to vector<8x8xf32>
    %118 = vector.extract_strided_slice %102 {offsets = [7, 0, 0], sizes = [1, 8, 8], strides = [1, 1, 1]} : vector<8x8x8xf32> to vector<1x8x8xf32>
    %119 = vector.shape_cast %118 : vector<1x8x8xf32> to vector<8x8xf32>
    %120 = tpu.concatenate %113, %115, %117, %119 in 1 : vector<8x8xf32>, vector<8x8xf32>, vector<8x8xf32>, vector<8x8xf32> -> vector<8x32xf32>
    %121 = tpu.concatenate %111, %120 in 0 : vector<8x32xf32>, vector<8x32xf32> -> vector<16x32xf32>
    %122 = arith.truncf %121 : vector<16x32xf32> to vector<16x32xbf16>
    %c0_20 = arith.constant 0 : index
    %c0_21 = arith.constant 0 : index
    %c0_22 = arith.constant 0 : index
    %123 = vector.load %arg5[%c0_20, %c0_21, %c0_22] : memref<2x32x32xbf16, #tpu.memory_space<vmem>>, vector<1x32x32xbf16>
    %124 = vector.shape_cast %123 : vector<1x32x32xbf16> to vector<32x32xbf16>
    %cst_23 = arith.constant dense<0.000000e+00> : vector<16x32xf32>
    %125 = tpu.matmul %122, %124, %cst_23 {dimension_numbers = #tpu.dot_dimension_numbers<[1], [0], [0], [1], [0, 0, 1, 1], [], []>} : vector<16x32xbf16>, vector<32x32xbf16>, vector<16x32xf32> -> vector<16x32xf32>
    %c0_24 = arith.constant 0 : index
    %c0_25 = arith.constant 0 : index
    %c0_26 = arith.constant 0 : index
    %126 = vector.load %arg6[%c0_24, %c0_25, %c0_26] : memref<2x1x32xf32, #tpu.memory_space<vmem>>, vector<1x1x32xf32>
    %127 = vector.shape_cast %126 : vector<1x1x32xf32> to vector<1x32xf32>
    %128 = vector.broadcast %127 : vector<1x32xf32> to vector<16x32xf32>
    %129 = arith.addf %125, %128 : vector<16x32xf32>
    %130 = arith.addf %129, %24 : vector<16x32xf32>
    %c0_27 = arith.constant 0 : index
    %c0_28 = arith.constant 0 : index
    %c0_29 = arith.constant 0 : index
    %131 = vector.load %arg7[%c0_27, %c0_28, %c0_29] : memref<2x1x32xf32, #tpu.memory_space<vmem>>, vector<1x1x32xf32>
    %132 = vector.shape_cast %131 : vector<1x1x32xf32> to vector<1x32xf32>
    %c0_30 = arith.constant 0 : index
    %c0_31 = arith.constant 0 : index
    %c0_32 = arith.constant 0 : index
    %133 = vector.load %arg8[%c0_30, %c0_31, %c0_32] : memref<2x1x32xf32, #tpu.memory_space<vmem>>, vector<1x1x32xf32>
    %134 = vector.shape_cast %133 : vector<1x1x32xf32> to vector<1x32xf32>
    %cst_33 = arith.constant dense<0.000000e+00> : vector<16xf32>
    %135 = vector.multi_reduction <add>, %130, %cst_33 [1] : vector<16x32xf32> to vector<16xf32>
    %136 = vector.shape_cast %135 : vector<16xf32> to vector<16x1xf32>
    %cst_34 = arith.constant 3.200000e+01 : f32
    %137 = vector.broadcast %cst_34 : f32 to vector<16x1xf32>
    %138 = arith.divf %136, %137 : vector<16x1xf32>
    %139 = vector.broadcast %138 : vector<16x1xf32> to vector<16x32xf32>
    %140 = arith.subf %130, %139 : vector<16x32xf32>
    %141 = arith.mulf %140, %140 : vector<16x32xf32>
    %cst_35 = arith.constant dense<0.000000e+00> : vector<16xf32>
    %142 = vector.multi_reduction <add>, %141, %cst_35 [1] : vector<16x32xf32> to vector<16xf32>
    %143 = vector.shape_cast %142 : vector<16xf32> to vector<16x1xf32>
    %cst_36 = arith.constant 3.200000e+01 : f32
    %144 = vector.broadcast %cst_36 : f32 to vector<16x1xf32>
    %145 = arith.divf %143, %144 : vector<16x1xf32>
    %146 = vector.broadcast %138 : vector<16x1xf32> to vector<16x32xf32>
    %147 = arith.subf %130, %146 : vector<16x32xf32>
    %cst_37 = arith.constant 9.99999996E-13 : f32
    %148 = vector.broadcast %cst_37 : f32 to vector<16x1xf32>
    %149 = arith.addf %145, %148 : vector<16x1xf32>
    %150 = math.rsqrt %149 : vector<16x1xf32>
    %151 = vector.broadcast %150 : vector<16x1xf32> to vector<16x32xf32>
    %152 = arith.mulf %147, %151 : vector<16x32xf32>
    %153 = vector.broadcast %132 : vector<1x32xf32> to vector<16x32xf32>
    %154 = arith.mulf %152, %153 : vector<16x32xf32>
    %155 = vector.broadcast %134 : vector<1x32xf32> to vector<16x32xf32>
    %156 = arith.addf %154, %155 : vector<16x32xf32>
    %157 = arith.truncf %156 : vector<16x32xf32> to vector<16x32xbf16>
    %c0_38 = arith.constant 0 : index
    %c0_39 = arith.constant 0 : index
    %c0_40 = arith.constant 0 : index
    %158 = vector.load %arg9[%c0_38, %c0_39, %c0_40] : memref<2x32x64xbf16, #tpu.memory_space<vmem>>, vector<1x32x64xbf16>
    %159 = vector.shape_cast %158 : vector<1x32x64xbf16> to vector<32x64xbf16>
    %cst_41 = arith.constant dense<0.000000e+00> : vector<16x64xf32>
    %160 = tpu.matmul %157, %159, %cst_41 {dimension_numbers = #tpu.dot_dimension_numbers<[1], [0], [0], [1], [0, 0, 1, 1], [], []>} : vector<16x32xbf16>, vector<32x64xbf16>, vector<16x64xf32> -> vector<16x64xf32>
    %c0_42 = arith.constant 0 : index
    %c0_43 = arith.constant 0 : index
    %c0_44 = arith.constant 0 : index
    %161 = vector.load %arg10[%c0_42, %c0_43, %c0_44] : memref<2x1x64xf32, #tpu.memory_space<vmem>>, vector<1x1x64xf32>
    %162 = vector.shape_cast %161 : vector<1x1x64xf32> to vector<1x64xf32>
    %163 = vector.broadcast %162 : vector<1x64xf32> to vector<16x64xf32>
    %164 = arith.addf %160, %163 : vector<16x64xf32>
    %165 = arith.mulf %164, %164 : vector<16x64xf32>
    %166 = arith.mulf %164, %165 : vector<16x64xf32>
    %cst_45 = arith.constant 4.471500e-02 : f32
    %167 = vector.broadcast %cst_45 : f32 to vector<16x64xf32>
    %168 = arith.mulf %167, %166 : vector<16x64xf32>
    %169 = arith.addf %164, %168 : vector<16x64xf32>
    %cst_46 = arith.constant 0.797884583 : f32
    %170 = vector.broadcast %cst_46 : f32 to vector<16x64xf32>
    %171 = arith.mulf %170, %169 : vector<16x64xf32>
    %172 = math.tanh %171 : vector<16x64xf32>
    %cst_47 = arith.constant 1.000000e+00 : f32
    %173 = vector.broadcast %cst_47 : f32 to vector<16x64xf32>
    %174 = arith.addf %173, %172 : vector<16x64xf32>
    %cst_48 = arith.constant 5.000000e-01 : f32
    %175 = vector.broadcast %cst_48 : f32 to vector<16x64xf32>
    %176 = arith.mulf %175, %174 : vector<16x64xf32>
    %177 = arith.mulf %164, %176 : vector<16x64xf32>
    %178 = arith.truncf %177 : vector<16x64xf32> to vector<16x64xbf16>
    %c0_49 = arith.constant 0 : index
    %c0_50 = arith.constant 0 : index
    %c0_51 = arith.constant 0 : index
    %179 = vector.load %arg11[%c0_49, %c0_50, %c0_51] : memref<2x64x32xbf16, #tpu.memory_space<vmem>>, vector<1x64x32xbf16>
    %180 = vector.shape_cast %179 : vector<1x64x32xbf16> to vector<64x32xbf16>
    %cst_52 = arith.constant dense<0.000000e+00> : vector<16x32xf32>
    %181 = tpu.matmul %178, %180, %cst_52 {dimension_numbers = #tpu.dot_dimension_numbers<[1], [0], [0], [1], [0, 0, 1, 1], [], []>} : vector<16x64xbf16>, vector<64x32xbf16>, vector<16x32xf32> -> vector<16x32xf32>
    %c0_53 = arith.constant 0 : index
    %c0_54 = arith.constant 0 : index
    %c0_55 = arith.constant 0 : index
    %182 = vector.load %arg12[%c0_53, %c0_54, %c0_55] : memref<2x1x32xf32, #tpu.memory_space<vmem>>, vector<1x1x32xf32>
    %183 = vector.shape_cast %182 : vector<1x1x32xf32> to vector<1x32xf32>
    %184 = vector.broadcast %183 : vector<1x32xf32> to vector<16x32xf32>
    %185 = arith.addf %181, %184 : vector<16x32xf32>
    %186 = arith.addf %185, %156 : vector<16x32xf32>
    %c0_56 = arith.constant 0 : index
    %c0_57 = arith.constant 0 : index
    %c0_58 = arith.constant 0 : index
    %187 = vector.load %arg13[%c0_56, %c0_57, %c0_58] : memref<2x1x32xf32, #tpu.memory_space<vmem>>, vector<1x1x32xf32>
    %188 = vector.shape_cast %187 : vector<1x1x32xf32> to vector<1x32xf32>
    %c0_59 = arith.constant 0 : index
    %c0_60 = arith.constant 0 : index
    %c0_61 = arith.constant 0 : index
    %189 = vector.load %arg14[%c0_59, %c0_60, %c0_61] : memref<2x1x32xf32, #tpu.memory_space<vmem>>, vector<1x1x32xf32>
    %190 = vector.shape_cast %189 : vector<1x1x32xf32> to vector<1x32xf32>
    %cst_62 = arith.constant dense<0.000000e+00> : vector<16xf32>
    %191 = vector.multi_reduction <add>, %186, %cst_62 [1] : vector<16x32xf32> to vector<16xf32>
    %192 = vector.shape_cast %191 : vector<16xf32> to vector<16x1xf32>
    %cst_63 = arith.constant 3.200000e+01 : f32
    %193 = vector.broadcast %cst_63 : f32 to vector<16x1xf32>
    %194 = arith.divf %192, %193 : vector<16x1xf32>
    %195 = vector.broadcast %194 : vector<16x1xf32> to vector<16x32xf32>
    %196 = arith.subf %186, %195 : vector<16x32xf32>
    %197 = arith.mulf %196, %196 : vector<16x32xf32>
    %cst_64 = arith.constant dense<0.000000e+00> : vector<16xf32>
    %198 = vector.multi_reduction <add>, %197, %cst_64 [1] : vector<16x32xf32> to vector<16xf32>
    %199 = vector.shape_cast %198 : vector<16xf32> to vector<16x1xf32>
    %cst_65 = arith.constant 3.200000e+01 : f32
    %200 = vector.broadcast %cst_65 : f32 to vector<16x1xf32>
    %201 = arith.divf %199, %200 : vector<16x1xf32>
    %202 = vector.broadcast %194 : vector<16x1xf32> to vector<16x32xf32>
    %203 = arith.subf %186, %202 : vector<16x32xf32>
    %cst_66 = arith.constant 9.99999996E-13 : f32
    %204 = vector.broadcast %cst_66 : f32 to vector<16x1xf32>
    %205 = arith.addf %201, %204 : vector<16x1xf32>
    %206 = math.rsqrt %205 : vector<16x1xf32>
    %207 = vector.broadcast %206 : vector<16x1xf32> to vector<16x32xf32>
    %208 = arith.mulf %203, %207 : vector<16x32xf32>
    %209 = vector.broadcast %188 : vector<1x32xf32> to vector<16x32xf32>
    %210 = arith.mulf %208, %209 : vector<16x32xf32>
    %211 = vector.broadcast %190 : vector<1x32xf32> to vector<16x32xf32>
    %212 = arith.addf %210, %211 : vector<16x32xf32>
    %213 = arith.truncf %212 : vector<16x32xf32> to vector<16x32xbf16>
    %c1 = arith.constant 1 : index
    %c0_67 = arith.constant 0 : index
    %c0_68 = arith.constant 0 : index
    %214 = vector.load %arg3[%c1, %c0_67, %c0_68] : memref<2x32x96xbf16, #tpu.memory_space<vmem>>, vector<1x32x96xbf16>
    %215 = vector.shape_cast %214 : vector<1x32x96xbf16> to vector<32x96xbf16>
    %cst_69 = arith.constant dense<0.000000e+00> : vector<16x96xf32>
    %216 = tpu.matmul %213, %215, %cst_69 {dimension_numbers = #tpu.dot_dimension_numbers<[1], [0], [0], [1], [0, 0, 1, 1], [], []>} : vector<16x32xbf16>, vector<32x96xbf16>, vector<16x96xf32> -> vector<16x96xf32>
    %c1_70 = arith.constant 1 : index
    %c0_71 = arith.constant 0 : index
    %c0_72 = arith.constant 0 : index
    %217 = vector.load %arg4[%c1_70, %c0_71, %c0_72] : memref<2x1x96xf32, #tpu.memory_space<vmem>>, vector<1x1x96xf32>
    %218 = vector.shape_cast %217 : vector<1x1x96xf32> to vector<1x96xf32>
    %219 = vector.broadcast %218 : vector<1x96xf32> to vector<16x96xf32>
    %220 = arith.addf %216, %219 : vector<16x96xf32>
    %221 = vector.extract_strided_slice %220 {offsets = [0, 0], sizes = [16, 32], strides = [1, 1]} : vector<16x96xf32> to vector<16x32xf32>
    %222 = vector.extract_strided_slice %220 {offsets = [0, 32], sizes = [16, 32], strides = [1, 1]} : vector<16x96xf32> to vector<16x32xf32>
    %223 = vector.extract_strided_slice %220 {offsets = [0, 64], sizes = [16, 32], strides = [1, 1]} : vector<16x96xf32> to vector<16x32xf32>
    %224 = vector.extract_strided_slice %221 {offsets = [0, 0], sizes = [8, 8], strides = [1, 1]} : vector<16x32xf32> to vector<8x8xf32>
    %225 = vector.extract_strided_slice %221 {offsets = [0, 8], sizes = [8, 8], strides = [1, 1]} : vector<16x32xf32> to vector<8x8xf32>
    %226 = vector.extract_strided_slice %221 {offsets = [0, 16], sizes = [8, 8], strides = [1, 1]} : vector<16x32xf32> to vector<8x8xf32>
    %227 = vector.extract_strided_slice %221 {offsets = [0, 24], sizes = [8, 8], strides = [1, 1]} : vector<16x32xf32> to vector<8x8xf32>
    %228 = vector.extract_strided_slice %221 {offsets = [8, 0], sizes = [8, 8], strides = [1, 1]} : vector<16x32xf32> to vector<8x8xf32>
    %229 = vector.extract_strided_slice %221 {offsets = [8, 8], sizes = [8, 8], strides = [1, 1]} : vector<16x32xf32> to vector<8x8xf32>
    %230 = vector.extract_strided_slice %221 {offsets = [8, 16], sizes = [8, 8], strides = [1, 1]} : vector<16x32xf32> to vector<8x8xf32>
    %231 = vector.extract_strided_slice %221 {offsets = [8, 24], sizes = [8, 8], strides = [1, 1]} : vector<16x32xf32> to vector<8x8xf32>
    %232 = vector.shape_cast %224 : vector<8x8xf32> to vector<1x8x8xf32>
    %233 = vector.shape_cast %225 : vector<8x8xf32> to vector<1x8x8xf32>
    %234 = vector.shape_cast %226 : vector<8x8xf32> to vector<1x8x8xf32>
    %235 = vector.shape_cast %227 : vector<8x8xf32> to vector<1x8x8xf32>
    %236 = vector.shape_cast %228 : vector<8x8xf32> to vector<1x8x8xf32>
    %237 = vector.shape_cast %229 : vector<8x8xf32> to vector<1x8x8xf32>
    %238 = vector.shape_cast %230 : vector<8x8xf32> to vector<1x8x8xf32>
    %239 = vector.shape_cast %231 : vector<8x8xf32> to vector<1x8x8xf32>
    %240 = tpu.concatenate %232, %233, %234, %235, %236, %237, %238, %239 in 0 : vector<1x8x8xf32>, vector<1x8x8xf32>, vector<1x8x8xf32>, vector<1x8x8xf32>, vector<1x8x8xf32>, vector<1x8x8xf32>, vector<1x8x8xf32>, vector<1x8x8xf32> -> vector<8x8x8xf32>
    %241 = arith.truncf %240 : vector<8x8x8xf32> to vector<8x8x8xbf16>
    %242 = vector.extract_strided_slice %222 {offsets = [0, 0], sizes = [8, 8], strides = [1, 1]} : vector<16x32xf32> to vector<8x8xf32>
    %243 = vector.extract_strided_slice %222 {offsets = [0, 8], sizes = [8, 8], strides = [1, 1]} : vector<16x32xf32> to vector<8x8xf32>
    %244 = vector.extract_strided_slice %222 {offsets = [0, 16], sizes = [8, 8], strides = [1, 1]} : vector<16x32xf32> to vector<8x8xf32>
    %245 = vector.extract_strided_slice %222 {offsets = [0, 24], sizes = [8, 8], strides = [1, 1]} : vector<16x32xf32> to vector<8x8xf32>
    %246 = vector.extract_strided_slice %222 {offsets = [8, 0], sizes = [8, 8], strides = [1, 1]} : vector<16x32xf32> to vector<8x8xf32>
    %247 = vector.extract_strided_slice %222 {offsets = [8, 8], sizes = [8, 8], strides = [1, 1]} : vector<16x32xf32> to vector<8x8xf32>
    %248 = vector.extract_strided_slice %222 {offsets = [8, 16], sizes = [8, 8], strides = [1, 1]} : vector<16x32xf32> to vector<8x8xf32>
    %249 = vector.extract_strided_slice %222 {offsets = [8, 24], sizes = [8, 8], strides = [1, 1]} : vector<16x32xf32> to vector<8x8xf32>
    %250 = vector.shape_cast %242 : vector<8x8xf32> to vector<1x8x8xf32>
    %251 = vector.shape_cast %243 : vector<8x8xf32> to vector<1x8x8xf32>
    %252 = vector.shape_cast %244 : vector<8x8xf32> to vector<1x8x8xf32>
    %253 = vector.shape_cast %245 : vector<8x8xf32> to vector<1x8x8xf32>
    %254 = vector.shape_cast %246 : vector<8x8xf32> to vector<1x8x8xf32>
    %255 = vector.shape_cast %247 : vector<8x8xf32> to vector<1x8x8xf32>
    %256 = vector.shape_cast %248 : vector<8x8xf32> to vector<1x8x8xf32>
    %257 = vector.shape_cast %249 : vector<8x8xf32> to vector<1x8x8xf32>
    %258 = tpu.concatenate %250, %251, %252, %253, %254, %255, %256, %257 in 0 : vector<1x8x8xf32>, vector<1x8x8xf32>, vector<1x8x8xf32>, vector<1x8x8xf32>, vector<1x8x8xf32>, vector<1x8x8xf32>, vector<1x8x8xf32>, vector<1x8x8xf32> -> vector<8x8x8xf32>
    %259 = arith.truncf %258 : vector<8x8x8xf32> to vector<8x8x8xbf16>
    %260 = vector.extract_strided_slice %223 {offsets = [0, 0], sizes = [8, 8], strides = [1, 1]} : vector<16x32xf32> to vector<8x8xf32>
    %261 = vector.extract_strided_slice %223 {offsets = [0, 8], sizes = [8, 8], strides = [1, 1]} : vector<16x32xf32> to vector<8x8xf32>
    %262 = vector.extract_strided_slice %223 {offsets = [0, 16], sizes = [8, 8], strides = [1, 1]} : vector<16x32xf32> to vector<8x8xf32>
    %263 = vector.extract_strided_slice %223 {offsets = [0, 24], sizes = [8, 8], strides = [1, 1]} : vector<16x32xf32> to vector<8x8xf32>
    %264 = vector.extract_strided_slice %223 {offsets = [8, 0], sizes = [8, 8], strides = [1, 1]} : vector<16x32xf32> to vector<8x8xf32>
    %265 = vector.extract_strided_slice %223 {offsets = [8, 8], sizes = [8, 8], strides = [1, 1]} : vector<16x32xf32> to vector<8x8xf32>
    %266 = vector.extract_strided_slice %223 {offsets = [8, 16], sizes = [8, 8], strides = [1, 1]} : vector<16x32xf32> to vector<8x8xf32>
    %267 = vector.extract_strided_slice %223 {offsets = [8, 24], sizes = [8, 8], strides = [1, 1]} : vector<16x32xf32> to vector<8x8xf32>
    %268 = vector.shape_cast %260 : vector<8x8xf32> to vector<1x8x8xf32>
    %269 = vector.shape_cast %261 : vector<8x8xf32> to vector<1x8x8xf32>
    %270 = vector.shape_cast %262 : vector<8x8xf32> to vector<1x8x8xf32>
    %271 = vector.shape_cast %263 : vector<8x8xf32> to vector<1x8x8xf32>
    %272 = vector.shape_cast %264 : vector<8x8xf32> to vector<1x8x8xf32>
    %273 = vector.shape_cast %265 : vector<8x8xf32> to vector<1x8x8xf32>
    %274 = vector.shape_cast %266 : vector<8x8xf32> to vector<1x8x8xf32>
    %275 = vector.shape_cast %267 : vector<8x8xf32> to vector<1x8x8xf32>
    %276 = tpu.concatenate %268, %269, %270, %271, %272, %273, %274, %275 in 0 : vector<1x8x8xf32>, vector<1x8x8xf32>, vector<1x8x8xf32>, vector<1x8x8xf32>, vector<1x8x8xf32>, vector<1x8x8xf32>, vector<1x8x8xf32>, vector<1x8x8xf32> -> vector<8x8x8xf32>
    %277 = arith.truncf %276 : vector<8x8x8xf32> to vector<8x8x8xbf16>
    %cst_73 = arith.constant dense<0.000000e+00> : vector<8x8x8xf32>
    %278 = tpu.matmul %241, %259, %cst_73 {dimension_numbers = #tpu.dot_dimension_numbers<[2], [2], [1], [1], [0, 0, 0, 1, 1, 1], [0], [0]>} : vector<8x8x8xbf16>, vector<8x8x8xbf16>, vector<8x8x8xf32> -> vector<8x8x8xf32>
    %cst_74 = arith.constant dense<0xFF800000> : vector<8x8xf32>
    %279 = vector.multi_reduction <maximumf>, %278, %cst_74 [2] : vector<8x8x8xf32> to vector<8x8xf32>
    %280 = vector.shape_cast %279 : vector<8x8xf32> to vector<8x8x1xf32>
    %281 = vector.broadcast %280 : vector<8x8x1xf32> to vector<8x8x8xf32>
    %282 = arith.subf %278, %281 : vector<8x8x8xf32>
    %283 = math.exp %282 : vector<8x8x8xf32>
    %cst_75 = arith.constant dense<0.000000e+00> : vector<8x8xf32>
    %284 = vector.multi_reduction <add>, %283, %cst_75 [2] : vector<8x8x8xf32> to vector<8x8xf32>
    %285 = vector.shape_cast %284 : vector<8x8xf32> to vector<8x8x1xf32>
    %286 = tpu.reciprocal %285 {approx = true} : vector<8x8x1xf32> -> vector<8x8x1xf32>
    %287 = vector.broadcast %286 : vector<8x8x1xf32> to vector<8x8x8xf32>
    %288 = arith.mulf %283, %287 : vector<8x8x8xf32>
    %289 = arith.truncf %288 : vector<8x8x8xf32> to vector<8x8x8xbf16>
    %cst_76 = arith.constant dense<0.000000e+00> : vector<8x8x8xf32>
    %290 = tpu.matmul %289, %277, %cst_76 {dimension_numbers = #tpu.dot_dimension_numbers<[2], [1], [1], [2], [0, 0, 0, 1, 1, 2], [0], [0]>} : vector<8x8x8xbf16>, vector<8x8x8xbf16>, vector<8x8x8xf32> -> vector<8x8x8xf32>
    %291 = vector.extract_strided_slice %290 {offsets = [0, 0, 0], sizes = [1, 8, 8], strides = [1, 1, 1]} : vector<8x8x8xf32> to vector<1x8x8xf32>
    %292 = vector.shape_cast %291 : vector<1x8x8xf32> to vector<8x8xf32>
    %293 = vector.extract_strided_slice %290 {offsets = [1, 0, 0], sizes = [1, 8, 8], strides = [1, 1, 1]} : vector<8x8x8xf32> to vector<1x8x8xf32>
    %294 = vector.shape_cast %293 : vector<1x8x8xf32> to vector<8x8xf32>
    %295 = vector.extract_strided_slice %290 {offsets = [2, 0, 0], sizes = [1, 8, 8], strides = [1, 1, 1]} : vector<8x8x8xf32> to vector<1x8x8xf32>
    %296 = vector.shape_cast %295 : vector<1x8x8xf32> to vector<8x8xf32>
    %297 = vector.extract_strided_slice %290 {offsets = [3, 0, 0], sizes = [1, 8, 8], strides = [1, 1, 1]} : vector<8x8x8xf32> to vector<1x8x8xf32>
    %298 = vector.shape_cast %297 : vector<1x8x8xf32> to vector<8x8xf32>
    %299 = tpu.concatenate %292, %294, %296, %298 in 1 : vector<8x8xf32>, vector<8x8xf32>, vector<8x8xf32>, vector<8x8xf32> -> vector<8x32xf32>
    %300 = vector.extract_strided_slice %290 {offsets = [4, 0, 0], sizes = [1, 8, 8], strides = [1, 1, 1]} : vector<8x8x8xf32> to vector<1x8x8xf32>
    %301 = vector.shape_cast %300 : vector<1x8x8xf32> to vector<8x8xf32>
    %302 = vector.extract_strided_slice %290 {offsets = [5, 0, 0], sizes = [1, 8, 8], strides = [1, 1, 1]} : vector<8x8x8xf32> to vector<1x8x8xf32>
    %303 = vector.shape_cast %302 : vector<1x8x8xf32> to vector<8x8xf32>
    %304 = vector.extract_strided_slice %290 {offsets = [6, 0, 0], sizes = [1, 8, 8], strides = [1, 1, 1]} : vector<8x8x8xf32> to vector<1x8x8xf32>
    %305 = vector.shape_cast %304 : vector<1x8x8xf32> to vector<8x8xf32>
    %306 = vector.extract_strided_slice %290 {offsets = [7, 0, 0], sizes = [1, 8, 8], strides = [1, 1, 1]} : vector<8x8x8xf32> to vector<1x8x8xf32>
    %307 = vector.shape_cast %306 : vector<1x8x8xf32> to vector<8x8xf32>
    %308 = tpu.concatenate %301, %303, %305, %307 in 1 : vector<8x8xf32>, vector<8x8xf32>, vector<8x8xf32>, vector<8x8xf32> -> vector<8x32xf32>
    %309 = tpu.concatenate %299, %308 in 0 : vector<8x32xf32>, vector<8x32xf32> -> vector<16x32xf32>
    %310 = arith.truncf %309 : vector<16x32xf32> to vector<16x32xbf16>
    %c1_77 = arith.constant 1 : index
    %c0_78 = arith.constant 0 : index
    %c0_79 = arith.constant 0 : index
    %311 = vector.load %arg5[%c1_77, %c0_78, %c0_79] : memref<2x32x32xbf16, #tpu.memory_space<vmem>>, vector<1x32x32xbf16>
    %312 = vector.shape_cast %311 : vector<1x32x32xbf16> to vector<32x32xbf16>
    %cst_80 = arith.constant dense<0.000000e+00> : vector<16x32xf32>
    %313 = tpu.matmul %310, %312, %cst_80 {dimension_numbers = #tpu.dot_dimension_numbers<[1], [0], [0], [1], [0, 0, 1, 1], [], []>} : vector<16x32xbf16>, vector<32x32xbf16>, vector<16x32xf32> -> vector<16x32xf32>
    %c1_81 = arith.constant 1 : index
    %c0_82 = arith.constant 0 : index
    %c0_83 = arith.constant 0 : index
    %314 = vector.load %arg6[%c1_81, %c0_82, %c0_83] : memref<2x1x32xf32, #tpu.memory_space<vmem>>, vector<1x1x32xf32>
    %315 = vector.shape_cast %314 : vector<1x1x32xf32> to vector<1x32xf32>
    %316 = vector.broadcast %315 : vector<1x32xf32> to vector<16x32xf32>
    %317 = arith.addf %313, %316 : vector<16x32xf32>
    %318 = arith.addf %317, %212 : vector<16x32xf32>
    %c1_84 = arith.constant 1 : index
    %c0_85 = arith.constant 0 : index
    %c0_86 = arith.constant 0 : index
    %319 = vector.load %arg7[%c1_84, %c0_85, %c0_86] : memref<2x1x32xf32, #tpu.memory_space<vmem>>, vector<1x1x32xf32>
    %320 = vector.shape_cast %319 : vector<1x1x32xf32> to vector<1x32xf32>
    %c1_87 = arith.constant 1 : index
    %c0_88 = arith.constant 0 : index
    %c0_89 = arith.constant 0 : index
    %321 = vector.load %arg8[%c1_87, %c0_88, %c0_89] : memref<2x1x32xf32, #tpu.memory_space<vmem>>, vector<1x1x32xf32>
    %322 = vector.shape_cast %321 : vector<1x1x32xf32> to vector<1x32xf32>
    %cst_90 = arith.constant dense<0.000000e+00> : vector<16xf32>
    %323 = vector.multi_reduction <add>, %318, %cst_90 [1] : vector<16x32xf32> to vector<16xf32>
    %324 = vector.shape_cast %323 : vector<16xf32> to vector<16x1xf32>
    %cst_91 = arith.constant 3.200000e+01 : f32
    %325 = vector.broadcast %cst_91 : f32 to vector<16x1xf32>
    %326 = arith.divf %324, %325 : vector<16x1xf32>
    %327 = vector.broadcast %326 : vector<16x1xf32> to vector<16x32xf32>
    %328 = arith.subf %318, %327 : vector<16x32xf32>
    %329 = arith.mulf %328, %328 : vector<16x32xf32>
    %cst_92 = arith.constant dense<0.000000e+00> : vector<16xf32>
    %330 = vector.multi_reduction <add>, %329, %cst_92 [1] : vector<16x32xf32> to vector<16xf32>
    %331 = vector.shape_cast %330 : vector<16xf32> to vector<16x1xf32>
    %cst_93 = arith.constant 3.200000e+01 : f32
    %332 = vector.broadcast %cst_93 : f32 to vector<16x1xf32>
    %333 = arith.divf %331, %332 : vector<16x1xf32>
    %334 = vector.broadcast %326 : vector<16x1xf32> to vector<16x32xf32>
    %335 = arith.subf %318, %334 : vector<16x32xf32>
    %cst_94 = arith.constant 9.99999996E-13 : f32
    %336 = vector.broadcast %cst_94 : f32 to vector<16x1xf32>
    %337 = arith.addf %333, %336 : vector<16x1xf32>
    %338 = math.rsqrt %337 : vector<16x1xf32>
    %339 = vector.broadcast %338 : vector<16x1xf32> to vector<16x32xf32>
    %340 = arith.mulf %335, %339 : vector<16x32xf32>
    %341 = vector.broadcast %320 : vector<1x32xf32> to vector<16x32xf32>
    %342 = arith.mulf %340, %341 : vector<16x32xf32>
    %343 = vector.broadcast %322 : vector<1x32xf32> to vector<16x32xf32>
    %344 = arith.addf %342, %343 : vector<16x32xf32>
    %345 = arith.truncf %344 : vector<16x32xf32> to vector<16x32xbf16>
    %c1_95 = arith.constant 1 : index
    %c0_96 = arith.constant 0 : index
    %c0_97 = arith.constant 0 : index
    %346 = vector.load %arg9[%c1_95, %c0_96, %c0_97] : memref<2x32x64xbf16, #tpu.memory_space<vmem>>, vector<1x32x64xbf16>
    %347 = vector.shape_cast %346 : vector<1x32x64xbf16> to vector<32x64xbf16>
    %cst_98 = arith.constant dense<0.000000e+00> : vector<16x64xf32>
    %348 = tpu.matmul %345, %347, %cst_98 {dimension_numbers = #tpu.dot_dimension_numbers<[1], [0], [0], [1], [0, 0, 1, 1], [], []>} : vector<16x32xbf16>, vector<32x64xbf16>, vector<16x64xf32> -> vector<16x64xf32>
    %c1_99 = arith.constant 1 : index
    %c0_100 = arith.constant 0 : index
    %c0_101 = arith.constant 0 : index
    %349 = vector.load %arg10[%c1_99, %c0_100, %c0_101] : memref<2x1x64xf32, #tpu.memory_space<vmem>>, vector<1x1x64xf32>
    %350 = vector.shape_cast %349 : vector<1x1x64xf32> to vector<1x64xf32>
    %351 = vector.broadcast %350 : vector<1x64xf32> to vector<16x64xf32>
    %352 = arith.addf %348, %351 : vector<16x64xf32>
    %353 = arith.mulf %352, %352 : vector<16x64xf32>
    %354 = arith.mulf %352, %353 : vector<16x64xf32>
    %cst_102 = arith.constant 4.471500e-02 : f32
    %355 = vector.broadcast %cst_102 : f32 to vector<16x64xf32>
    %356 = arith.mulf %355, %354 : vector<16x64xf32>
    %357 = arith.addf %352, %356 : vector<16x64xf32>
    %cst_103 = arith.constant 0.797884583 : f32
    %358 = vector.broadcast %cst_103 : f32 to vector<16x64xf32>
    %359 = arith.mulf %358, %357 : vector<16x64xf32>
    %360 = math.tanh %359 : vector<16x64xf32>
    %cst_104 = arith.constant 1.000000e+00 : f32
    %361 = vector.broadcast %cst_104 : f32 to vector<16x64xf32>
    %362 = arith.addf %361, %360 : vector<16x64xf32>
    %cst_105 = arith.constant 5.000000e-01 : f32
    %363 = vector.broadcast %cst_105 : f32 to vector<16x64xf32>
    %364 = arith.mulf %363, %362 : vector<16x64xf32>
    %365 = arith.mulf %352, %364 : vector<16x64xf32>
    %366 = arith.truncf %365 : vector<16x64xf32> to vector<16x64xbf16>
    %c1_106 = arith.constant 1 : index
    %c0_107 = arith.constant 0 : index
    %c0_108 = arith.constant 0 : index
    %367 = vector.load %arg11[%c1_106, %c0_107, %c0_108] : memref<2x64x32xbf16, #tpu.memory_space<vmem>>, vector<1x64x32xbf16>
    %368 = vector.shape_cast %367 : vector<1x64x32xbf16> to vector<64x32xbf16>
    %cst_109 = arith.constant dense<0.000000e+00> : vector<16x32xf32>
    %369 = tpu.matmul %366, %368, %cst_109 {dimension_numbers = #tpu.dot_dimension_numbers<[1], [0], [0], [1], [0, 0, 1, 1], [], []>} : vector<16x64xbf16>, vector<64x32xbf16>, vector<16x32xf32> -> vector<16x32xf32>
    %c1_110 = arith.constant 1 : index
    %c0_111 = arith.constant 0 : index
    %c0_112 = arith.constant 0 : index
    %370 = vector.load %arg12[%c1_110, %c0_111, %c0_112] : memref<2x1x32xf32, #tpu.memory_space<vmem>>, vector<1x1x32xf32>
    %371 = vector.shape_cast %370 : vector<1x1x32xf32> to vector<1x32xf32>
    %372 = vector.broadcast %371 : vector<1x32xf32> to vector<16x32xf32>
    %373 = arith.addf %369, %372 : vector<16x32xf32>
    %374 = arith.addf %373, %344 : vector<16x32xf32>
    %c1_113 = arith.constant 1 : index
    %c0_114 = arith.constant 0 : index
    %c0_115 = arith.constant 0 : index
    %375 = vector.load %arg13[%c1_113, %c0_114, %c0_115] : memref<2x1x32xf32, #tpu.memory_space<vmem>>, vector<1x1x32xf32>
    %376 = vector.shape_cast %375 : vector<1x1x32xf32> to vector<1x32xf32>
    %c1_116 = arith.constant 1 : index
    %c0_117 = arith.constant 0 : index
    %c0_118 = arith.constant 0 : index
    %377 = vector.load %arg14[%c1_116, %c0_117, %c0_118] : memref<2x1x32xf32, #tpu.memory_space<vmem>>, vector<1x1x32xf32>
    %378 = vector.shape_cast %377 : vector<1x1x32xf32> to vector<1x32xf32>
    %cst_119 = arith.constant dense<0.000000e+00> : vector<16xf32>
    %379 = vector.multi_reduction <add>, %374, %cst_119 [1] : vector<16x32xf32> to vector<16xf32>
    %380 = vector.shape_cast %379 : vector<16xf32> to vector<16x1xf32>
    %cst_120 = arith.constant 3.200000e+01 : f32
    %381 = vector.broadcast %cst_120 : f32 to vector<16x1xf32>
    %382 = arith.divf %380, %381 : vector<16x1xf32>
    %383 = vector.broadcast %382 : vector<16x1xf32> to vector<16x32xf32>
    %384 = arith.subf %374, %383 : vector<16x32xf32>
    %385 = arith.mulf %384, %384 : vector<16x32xf32>
    %cst_121 = arith.constant dense<0.000000e+00> : vector<16xf32>
    %386 = vector.multi_reduction <add>, %385, %cst_121 [1] : vector<16x32xf32> to vector<16xf32>
    %387 = vector.shape_cast %386 : vector<16xf32> to vector<16x1xf32>
    %cst_122 = arith.constant 3.200000e+01 : f32
    %388 = vector.broadcast %cst_122 : f32 to vector<16x1xf32>
    %389 = arith.divf %387, %388 : vector<16x1xf32>
    %390 = vector.broadcast %382 : vector<16x1xf32> to vector<16x32xf32>
    %391 = arith.subf %374, %390 : vector<16x32xf32>
    %cst_123 = arith.constant 9.99999996E-13 : f32
    %392 = vector.broadcast %cst_123 : f32 to vector<16x1xf32>
    %393 = arith.addf %389, %392 : vector<16x1xf32>
    %394 = math.rsqrt %393 : vector<16x1xf32>
    %395 = vector.broadcast %394 : vector<16x1xf32> to vector<16x32xf32>
    %396 = arith.mulf %391, %395 : vector<16x32xf32>
    %397 = vector.broadcast %376 : vector<1x32xf32> to vector<16x32xf32>
    %398 = arith.mulf %396, %397 : vector<16x32xf32>
    %399 = vector.broadcast %378 : vector<1x32xf32> to vector<16x32xf32>
    %400 = arith.addf %398, %399 : vector<16x32xf32>
    %401 = vector.extract_strided_slice %400 {offsets = [0, 0], sizes = [1, 32], strides = [1, 1]} : vector<16x32xf32> to vector<1x32xf32>
    %402 = vector.extract_strided_slice %400 {offsets = [8, 0], sizes = [1, 32], strides = [1, 1]} : vector<16x32xf32> to vector<1x32xf32>
    %403 = tpu.concatenate %401, %402 in 0 : vector<1x32xf32>, vector<1x32xf32> -> vector<2x32xf32>
    %404 = arith.truncf %403 : vector<2x32xf32> to vector<2x32xbf16>
    %c0_124 = arith.constant 0 : index
    %c0_125 = arith.constant 0 : index
    %405 = vector.load %arg15[%c0_124, %c0_125] : memref<32x32xbf16, #tpu.memory_space<vmem>>, vector<32x32xbf16>
    %cst_126 = arith.constant dense<0.000000e+00> : vector<2x32xf32>
    %406 = tpu.matmul %404, %405, %cst_126 {dimension_numbers = #tpu.dot_dimension_numbers<[1], [0], [0], [1], [0, 0, 1, 1], [], []>} : vector<2x32xbf16>, vector<32x32xbf16>, vector<2x32xf32> -> vector<2x32xf32>
    %c0_127 = arith.constant 0 : index
    %c0_128 = arith.constant 0 : index
    %407 = vector.load %arg16[%c0_127, %c0_128] : memref<1x32xf32, #tpu.memory_space<vmem>>, vector<1x32xf32>
    %408 = vector.broadcast %407 : vector<1x32xf32> to vector<2x32xf32>
    %409 = arith.addf %406, %408 : vector<2x32xf32>
    %410 = math.tanh %409 : vector<2x32xf32>
    %411 = arith.truncf %410 : vector<2x32xf32> to vector<2x32xbf16>
    %c0_129 = arith.constant 0 : index
    %c0_130 = arith.constant 0 : index
    %412 = vector.load %arg17[%c0_129, %c0_130] : memref<32x128xbf16, #tpu.memory_space<vmem>>, vector<32x128xbf16>
    %cst_131 = arith.constant dense<0.000000e+00> : vector<2x128xf32>
    %413 = tpu.matmul %411, %412, %cst_131 {dimension_numbers = #tpu.dot_dimension_numbers<[1], [0], [0], [1], [0, 0, 1, 1], [], []>} : vector<2x32xbf16>, vector<32x128xbf16>, vector<2x128xf32> -> vector<2x128xf32>
    %c0_132 = arith.constant 0 : index
    %c0_133 = arith.constant 0 : index
    %414 = vector.load %arg18[%c0_132, %c0_133] : memref<1x128xf32, #tpu.memory_space<vmem>>, vector<1x128xf32>
    %415 = vector.broadcast %414 : vector<1x128xf32> to vector<2x128xf32>
    %416 = arith.addf %413, %415 : vector<2x128xf32>
    %c0_134 = arith.constant 0 : index
    %c0_135 = arith.constant 0 : index
    %417 = vector.load %arg19[%c0_134, %c0_135] : memref<2x128xf32, #tpu.memory_space<vmem>>, vector<2x128xf32>
    tpu.vector_store %arg19[%c0_134, %c0_135], %416 {strides = array<i32>} : memref<2x128xf32, #tpu.memory_space<vmem>>, vector<2x128xf32>,
    return
  }
}

</mosaic_0001>

<llo_original>
// kernel: tpu_custom_call.1
$region0: #{tpu_custom_call.1}
  #allocation0 [shape = 'u32[]', space=smem, size = 0x4, offset = 0x4, fixed_abs, tag = 'smem constant byte address 0x4 - core index']
  #allocation1 [shape = 'u32[72,128]{1,0:T(1,128)}', space=vmem, size = 0x9000, scoped, tag = 'internal scratch']
  %s0 = inlined_call_operand.hbm [shape: f32[16,32], index: 0, kind: input, shape index: {}]
  %s1 = inlined_call_operand.hbm [shape: f32[1,32], index: 1, kind: input, shape index: {}]
  %s2 = inlined_call_operand.vmem [shape: f32[1,32], index: 2, kind: input, shape index: {}]
  %s3 = inlined_call_operand.vmem [shape: bf16[2,32,96], index: 3, kind: input, shape index: {}]
  %s4 = inlined_call_operand.vmem [shape: f32[2,1,96], index: 4, kind: input, shape index: {}]
  %s5 = inlined_call_operand.vmem [shape: bf16[2,32,32], index: 5, kind: input, shape index: {}]
  %s6 = inlined_call_operand.vmem [shape: f32[2,1,32], index: 6, kind: input, shape index: {}]
  %s7 = inlined_call_operand.hbm [shape: f32[2,1,32], index: 7, kind: input, shape index: {}]
  %s8 = inlined_call_operand.vmem [shape: f32[2,1,32], index: 8, kind: input, shape index: {}]
  %s9 = inlined_call_operand.vmem [shape: bf16[2,32,64], index: 9, kind: input, shape index: {}]
  %s10 = inlined_call_operand.vmem [shape: f32[2,1,64], index: 10, kind: input, shape index: {}]
  %s11 = inlined_call_operand.vmem [shape: bf16[2,64,32], index: 11, kind: input, shape index: {}]
  %s12 = inlined_call_operand.vmem [shape: f32[2,1,32], index: 12, kind: input, shape index: {}]
  %s13 = inlined_call_operand.hbm [shape: f32[2,1,32], index: 13, kind: input, shape index: {}]
  %s14 = inlined_call_operand.vmem [shape: f32[2,1,32], index: 14, kind: input, shape index: {}]
  %s15 = inlined_call_operand.hbm [shape: bf16[32,32], index: 15, kind: input, shape index: {}]
  %s16 = inlined_call_operand.vmem [shape: f32[1,32], index: 16, kind: input, shape index: {}]
  %s17 = inlined_call_operand.hbm [shape: bf16[32,128], index: 17, kind: input, shape index: {}]
  %s18 = inlined_call_operand.vmem [shape: f32[1,128], index: 18, kind: input, shape index: {}]
  %s19 = inlined_call_operand.hbm [shape: f32[2,128], index: 19, kind: output, shape index: {}]
  %s20 = sld [smem:[#allocation0]]
  $region110: #{tpu_custom_call.1} parent=0
    _
  %s22 = ssub.s32 1, %s20
  %s23 = scalar_select 0, %s22, %s20
  $region1: #{tpu_custom_call.1} parent=0
    #allocation2 [shape = 'u8[8192]{0}', space=vmem, size = 0x2000, scoped, tag = 'input window, operand 0, single buffered']
    #allocation3 [shape = 's32[1]{0}', space=sflag, size = 0x4, scoped, tag = 'scoped memory for tpu_custom_call.1']
    #allocation4 [shape = 's32[1]{0}', space=sflag, size = 0x4, scoped, tag = 'scoped memory for tpu_custom_call.1']
    #allocation5 [shape = 'u8[512]{0}', space=vmem, size = 0x400, scoped, tag = 'input window, operand 1, single buffered']
    #allocation6 [shape = 's32[1]{0}', space=sflag, size = 0x4, scoped, tag = 'scoped memory for tpu_custom_call.1']
    #allocation7 [shape = 'u8[1024]{0}', space=vmem, size = 0x400, scoped, tag = 'input window, operand 7, single buffered']
    #allocation8 [shape = 'u8[1024]{0}', space=vmem, size = 0x400, scoped, tag = 'input window, operand 13, single buffered']
    #allocation9 [shape = 's32[1]{0}', space=sflag, size = 0x4, scoped, tag = 'scoped memory for tpu_custom_call.1']
    #allocation10 [shape = 'u8[8192]{0}', space=vmem, size = 0x2000, scoped, tag = 'input window, operand 15, single buffered']
    #allocation11 [shape = 'u8[8192]{0}', space=vmem, size = 0x2000, scoped, tag = 'input window, operand 17, single buffered']
    #allocation12 [shape = 's32[1]{0}', space=sflag, size = 0x4, scoped, tag = 'scoped memory for tpu_custom_call.1']
    #allocation13 [shape = 'u8[1024]{0}', space=vmem, size = 0x400, scoped, tag = 'output window, operand 0, single buffered']
    %24 = vsyncpa [#allocation3], 0
    %25 = vsyncpa [#allocation6], 0
    %26 = vsyncpa [#allocation9], 0
    %27 = vsyncpa [#allocation12], 0
    %28 = vsyncpa [#allocation4], 0
    // Predicated region
    $region2: #{tpu_custom_call.1} parent=1 // pred_check
      _
    $region3: #{tpu_custom_call.1} parent=1 // pred_check_branch
      %30 = sbr.rel (0) target = $region5
    $region4: #{tpu_custom_call.1} parent=1 // pred_region
      %32 = vsyncadd [#allocation3], 0
      %s33 = sshll.u32 %s0, 4
      %s34 = int_to_ptr.hbm [resolvable:$true] %s33
      %s35 = sshll.u32 [#allocation2], 4
      %s36 = int_to_ptr.vmem [resolvable:$true] %s35
      %41 = dma.hbm_to_vmem [thread:$0]  %s34, 256, %s36, [#allocation3], 128, 128, 8
    $region5: #{tpu_custom_call.1} parent=1 // pred_fallthru
      _
    // Predicated region
    $region6: #{tpu_custom_call.1} parent=1 // pred_check
      _
    $region7: #{tpu_custom_call.1} parent=1 // pred_check_branch
      %43 = sbr.rel (0) target = $region9
    $region8: #{tpu_custom_call.1} parent=1 // pred_region
      %45 = vsyncadd [#allocation6], 0
      %s47 = sshll.u32 %s1, 4
      %s48 = int_to_ptr.hbm [resolvable:$true] %s47
      %s49 = sshll.u32 [#allocation5], 4
      %s50 = int_to_ptr.vmem [resolvable:$true] %s49
      %52 = dma.hbm_to_vmem [thread:$0]  %s48, 16, %s50, [#allocation6]
    $region9: #{tpu_custom_call.1} parent=1 // pred_fallthru
      _
    // Predicated region
    $region10: #{tpu_custom_call.1} parent=1 // pred_check
      _
    $region11: #{tpu_custom_call.1} parent=1 // pred_check_branch
      %54 = sbr.rel (0) target = $region13
    $region12: #{tpu_custom_call.1} parent=1 // pred_region
      _
    $region13: #{tpu_custom_call.1} parent=1 // pred_fallthru
      _
    // Predicated region
    $region14: #{tpu_custom_call.1} parent=1 // pred_check
      _
    $region15: #{tpu_custom_call.1} parent=1 // pred_check_branch
      %56 = sbr.rel (0) target = $region17
    $region16: #{tpu_custom_call.1} parent=1 // pred_region
      _
    $region17: #{tpu_custom_call.1} parent=1 // pred_fallthru
      _
    // Predicated region
    $region18: #{tpu_custom_call.1} parent=1 // pred_check
      _
    $region19: #{tpu_custom_call.1} parent=1 // pred_check_branch
      %58 = sbr.rel (0) target = $region21
    $region20: #{tpu_custom_call.1} parent=1 // pred_region
      _
    $region21: #{tpu_custom_call.1} parent=1 // pred_fallthru
      _
    // Predicated region
    $region22: #{tpu_custom_call.1} parent=1 // pred_check
      _
    $region23: #{tpu_custom_call.1} parent=1 // pred_check_branch
      %60 = sbr.rel (0) target = $region25
    $region24: #{tpu_custom_call.1} parent=1 // pred_region
      _
    $region25: #{tpu_custom_call.1} parent=1 // pred_fallthru
      _
    // Predicated region
    $region26: #{tpu_custom_call.1} parent=1 // pred_check
      _
    $region27: #{tpu_custom_call.1} parent=1 // pred_check_branch
      %62 = sbr.rel (0) target = $region29
    $region28: #{tpu_custom_call.1} parent=1 // pred_region
      _
    $region29: #{tpu_custom_call.1} parent=1 // pred_fallthru
      _
    // Predicated region
    $region30: #{tpu_custom_call.1} parent=1 // pred_check
      _
    $region31: #{tpu_custom_call.1} parent=1 // pred_check_branch
      %64 = sbr.rel (0) target = $region33
    $region32: #{tpu_custom_call.1} parent=1 // pred_region
      %66 = vsyncadd [#allocation6], 0
      %s67 = sshll.u32 %s7, 4
      %s68 = int_to_ptr.hbm [resolvable:$true] %s67
      %s69 = sshll.u32 [#allocation7], 4
      %s70 = int_to_ptr.vmem [resolvable:$true] %s69
      %75 = dma.hbm_to_vmem [thread:$0]  %s68, 32, %s70, [#allocation6], 16, 16, 1
    $region33: #{tpu_custom_call.1} parent=1 // pred_fallthru
      _
    // Predicated region
    $region34: #{tpu_custom_call.1} parent=1 // pred_check
      _
    $region35: #{tpu_custom_call.1} parent=1 // pred_check_branch
      %77 = sbr.rel (0) target = $region37
    $region36: #{tpu_custom_call.1} parent=1 // pred_region
      _
    $region37: #{tpu_custom_call.1} parent=1 // pred_fallthru
      _
    // Predicated region
    $region38: #{tpu_custom_call.1} parent=1 // pred_check
      _
    $region39: #{tpu_custom_call.1} parent=1 // pred_check_branch
      %79 = sbr.rel (0) target = $region41
    $region40: #{tpu_custom_call.1} parent=1 // pred_region
      _
    $region41: #{tpu_custom_call.1} parent=1 // pred_fallthru
      _
    // Predicated region
    $region42: #{tpu_custom_call.1} parent=1 // pred_check
      _
    $region43: #{tpu_custom_call.1} parent=1 // pred_check_branch
      %81 = sbr.rel (0) target = $region45
    $region44: #{tpu_custom_call.1} parent=1 // pred_region
      _
    $region45: #{tpu_custom_call.1} parent=1 // pred_fallthru
      _
    // Predicated region
    $region46: #{tpu_custom_call.1} parent=1 // pred_check
      _
    $region47: #{tpu_custom_call.1} parent=1 // pred_check_branch
      %83 = sbr.rel (0) target = $region49
    $region48: #{tpu_custom_call.1} parent=1 // pred_region
      _
    $region49: #{tpu_custom_call.1} parent=1 // pred_fallthru
      _
    // Predicated region
    $region50: #{tpu_custom_call.1} parent=1 // pred_check
      _
    $region51: #{tpu_custom_call.1} parent=1 // pred_check_branch
      %85 = sbr.rel (0) target = $region53
    $region52: #{tpu_custom_call.1} parent=1 // pred_region
      _
    $region53: #{tpu_custom_call.1} parent=1 // pred_fallthru
      _
    // Predicated region
    $region54: #{tpu_custom_call.1} parent=1 // pred_check
      _
    $region55: #{tpu_custom_call.1} parent=1 // pred_check_branch
      %87 = sbr.rel (0) target = $region57
    $region56: #{tpu_custom_call.1} parent=1 // pred_region
      %89 = vsyncadd [#allocation9], 0
      %s90 = sshll.u32 %s13, 4
      %s91 = int_to_ptr.hbm [resolvable:$true] %s90
      %s92 = sshll.u32 [#allocation8], 4
      %s93 = int_to_ptr.vmem [resolvable:$true] %s92
      %98 = dma.hbm_to_vmem [thread:$0]  %s91, 32, %s93, [#allocation9], 16, 16, 1
    $region57: #{tpu_custom_call.1} parent=1 // pred_fallthru
      _
    // Predicated region
    $region58: #{tpu_custom_call.1} parent=1 // pred_check
      _
    $region59: #{tpu_custom_call.1} parent=1 // pred_check_branch
      %100 = sbr.rel (0) target = $region61
    $region60: #{tpu_custom_call.1} parent=1 // pred_region
      _
    $region61: #{tpu_custom_call.1} parent=1 // pred_fallthru
      _
    // Predicated region
    $region62: #{tpu_custom_call.1} parent=1 // pred_check
      _
    $region63: #{tpu_custom_call.1} parent=1 // pred_check_branch
      %102 = sbr.rel (0) target = $region65
    $region64: #{tpu_custom_call.1} parent=1 // pred_region
      %104 = vsyncadd [#allocation9], 0
      %s105 = sshll.u32 %s15, 4
      %s106 = int_to_ptr.hbm [resolvable:$true] %s105
      %s107 = sshll.u32 [#allocation10], 4
      %s108 = int_to_ptr.vmem [resolvable:$true] %s107
      %113 = dma.hbm_to_vmem [thread:$0]  %s106, 256, %s108, [#allocation9], 64, 64, 4
    $region65: #{tpu_custom_call.1} parent=1 // pred_fallthru
      _
    // Predicated region
    $region66: #{tpu_custom_call.1} parent=1 // pred_check
      _
    $region67: #{tpu_custom_call.1} parent=1 // pred_check_branch
      %115 = sbr.rel (0) target = $region69
    $region68: #{tpu_custom_call.1} parent=1 // pred_region
      _
    $region69: #{tpu_custom_call.1} parent=1 // pred_fallthru
      _
    // Predicated region
    $region70: #{tpu_custom_call.1} parent=1 // pred_check
      _
    $region71: #{tpu_custom_call.1} parent=1 // pred_check_branch
      %117 = sbr.rel (0) target = $region73
    $region72: #{tpu_custom_call.1} parent=1 // pred_region
      %119 = vsyncadd [#allocation12], 0
      %s120 = sshll.u32 %s17, 4
      %s121 = int_to_ptr.hbm [resolvable:$true] %s120
      %s122 = sshll.u32 [#allocation11], 4
      %s123 = int_to_ptr.vmem [resolvable:$true] %s122
      %128 = dma.hbm_to_vmem [thread:$0]  %s121, 256, %s123, [#allocation12], 64, 64, 4
    $region73: #{tpu_custom_call.1} parent=1 // pred_fallthru
      _
    // Predicated region
    $region74: #{tpu_custom_call.1} parent=1 // pred_check
      _
    $region75: #{tpu_custom_call.1} parent=1 // pred_check_branch
      %130 = sbr.rel (0) target = $region77
    $region76: #{tpu_custom_call.1} parent=1 // pred_region
      _
    $region77: #{tpu_custom_call.1} parent=1 // pred_fallthru
      _
    // Predicated region
    $region78: #{tpu_custom_call.1} parent=1 // pred_check
      _
    $region79: #{tpu_custom_call.1} parent=1 // pred_check_branch
      %132 = sbr.rel (0) target = $region81
    $region80: #{tpu_custom_call.1} parent=1 // pred_region
      %134 = dma.done [#allocation3], 256
    $region81: #{tpu_custom_call.1} parent=1 // pred_fallthru
      _
    // Predicated region
    $region82: #{tpu_custom_call.1} parent=1 // pred_check
      _
    $region83: #{tpu_custom_call.1} parent=1 // pred_check_branch
      %136 = sbr.rel (0) target = $region85
    $region84: #{tpu_custom_call.1} parent=1 // pred_region
      %138 = dma.done [#allocation6], 16
    $region85: #{tpu_custom_call.1} parent=1 // pred_fallthru
      _
    // Predicated region
    $region86: #{tpu_custom_call.1} parent=1 // pred_check
      _
    $region87: #{tpu_custom_call.1} parent=1 // pred_check_branch
      %140 = sbr.rel (0) target = $region89
    $region88: #{tpu_custom_call.1} parent=1 // pred_region
      %142 = dma.done [#allocation6], 32
    $region89: #{tpu_custom_call.1} parent=1 // pred_fallthru
      _
    // Predicated region
    $region90: #{tpu_custom_call.1} parent=1 // pred_check
      _
    $region91: #{tpu_custom_call.1} parent=1 // pred_check_branch
      %144 = sbr.rel (0) target = $region93
    $region92: #{tpu_custom_call.1} parent=1 // pred_region
      %146 = dma.done [#allocation9], 32
    $region93: #{tpu_custom_call.1} parent=1 // pred_fallthru
      _
    // Predicated region
    $region94: #{tpu_custom_call.1} parent=1 // pred_check
      _
    $region95: #{tpu_custom_call.1} parent=1 // pred_check_branch
      %148 = sbr.rel (0) target = $region97
    $region96: #{tpu_custom_call.1} parent=1 // pred_region
      %150 = dma.done [#allocation9], 256
    $region97: #{tpu_custom_call.1} parent=1 // pred_fallthru
      _
    // Predicated region
    $region98: #{tpu_custom_call.1} parent=1 // pred_check
      _
    $region99: #{tpu_custom_call.1} parent=1 // pred_check_branch
      %152 = sbr.rel (0) target = $region101
    $region100: #{tpu_custom_call.1} parent=1 // pred_region
      %154 = dma.done [#allocation12], 256
    $region101: #{tpu_custom_call.1} parent=1 // pred_fallthru
      _
    %v156 = vld [vmem:[#allocation2] sm:$0xff]
    %v157 = vld [vmem:[#allocation2 + $0x8] sm:$0xff]
    %v158 = vld [vmem:[#allocation5] sm:$0x1]
    %v159 = vld [vmem:[%s2] sm:$0x1]
    %vm160 = vcmask 261120
    %v161 = vsel %vm160, %v156, 0.0
    %162 = vadd.xlane.f32.xlu0 %v161
    %v163 = vpop.xlane.xlu0 %162
    %v164 = vsel %vm160, %v157, 0.0
    %165 = vadd.xlane.f32.xlu0 %v164
    %v166 = vpop.xlane.xlu0 %165
    %v167 = vrcp.pop 32.0
    %v168 = vmul.f32 32.0, %v167
    %v169 = vsub.f32 1.0, %v168
    %v170 = vmul.f32 %v167, %v169
    %v171 = vadd.f32 %v167, %v170
    %vm172 = vweird.f32 %v167
    %v173 = vsel %vm172, %v167, %v171
    %v174 = vmul.f32 %v163, %v173
    %v175 = vmul.f32 %v166, %v173
    %v176 = vsub.f32 %v156, %v174
    %v177 = vsub.f32 %v157, %v175
    %v178 = vmul.f32 %v176, %v176
    %v179 = vmul.f32 %v177, %v177
    %v180 = vsel %vm160, %v178, 0.0
    %181 = vadd.xlane.f32.xlu0 %v180
    %v182 = vpop.xlane.xlu0 %181
    %v183 = vsel %vm160, %v179, 0.0
    %184 = vadd.xlane.f32.xlu0 %v183
    %v185 = vpop.xlane.xlu0 %184
    %v186 = vmul.f32 %v182, %v173
    %v187 = vmul.f32 %v185, %v173
    %v188 = vadd.f32 %v186, 1e-12
    %v189 = vadd.f32 %v187, 1e-12
    %v190 = vrsqrt.pop %v188
    %v191 = vmul.f32 %v190, %v188
    %v192 = vmul.f32 %v191, %v190
    %v193 = vmul.f32 0.5, %v192
    %v194 = vsub.f32 1.5, %v193
    %v195 = vmul.f32 %v190, %v194
    %vm196 = vweird.f32 %v188
    %vm197 = vweird.f32 %v190
    %vm198 = vmor %vm196, %vm197
    %v199 = vsel %vm198, %v190, %v195
    %v200 = vrsqrt.pop %v189
    %v201 = vmul.f32 %v200, %v189
    %v202 = vmul.f32 %v201, %v200
    %v203 = vmul.f32 0.5, %v202
    %v204 = vsub.f32 1.5, %v203
    %v205 = vmul.f32 %v200, %v204
    %vm206 = vweird.f32 %v189
    %vm207 = vweird.f32 %v200
    %vm208 = vmor %vm206, %vm207
    %v209 = vsel %vm208, %v200, %v205
    %v210 = vmul.f32 %v176, %v199
    %v211 = vmul.f32 %v177, %v209
    %v213 = vperm.slane %v158, 0
    %v215 = vmul.f32 %v210, %v213
    %v216 = vmul.f32 %v211, %v213
    %v218 = vperm.slane %v159, 0
    %v220 = vadd.f32 %v215, %v218
    %v221 = vadd.f32 %v216, %v218
    %v222 = vpack.c.bf16 %v221, %v220
    %v223 = vld [vmem:[%s3] sm:$0xf]
    %v224 = vld [vmem:[%s3 + $0x4] sm:$0xf]
    %v225 = vld [vmem:[%s3 + $0x8] sm:$0xf]
    %v226 = vld [vmem:[%s3 + $0xc] sm:$0xf]
    %v227 = vld [vmem:[%s4] sm:$0x1]
    %v229 = vperm.slane %v227, 0
    %v235 = vunpack.c.l.b16 %v223
    %v236 = vunpack.c.l.b16 %v224
    %v237 = vunpack.c.l.b16 %v225
    %v238 = vunpack.c.l.b16 %v226
    %v239 = vpack.c.b16 %v236, %v235
    %v240 = vpack.c.b16 %v238, %v237
    %v244 = vsel %vm160, %v222, 0
    %246 = vmatpush.bf16.msra.mxu0 0
    %247 = vmatpush.bf16.msra.mxu0 0
    %248 = vmatpush.bf16.msra.mxu0 0
    %249 = vmatpush.bf16.msra.mxu0 0
    %250 = vmatpush.bf16.msra.mxu0 0
    %251 = vmatpush.bf16.msra.mxu0 0
    %252 = vmatpush.bf16.msra.mxu0 %v240
    %253 = vmatpush.bf16.msra.mxu0 %v239
    %254 = vmatmul.bf16.gmra.mxu0 %v244
    %v255 = vpop.f32.mrf.mxu0
    %v256 = vadd.f32 %v229, %v255
    %v257 = vpop.f32.mrf.mxu0
    %v258 = vadd.f32 %v229, %v257
    %259 = vdwg.mxu0
    %261 = vrot.lane.b32.xlu0 %v256, 120
    %v262 = vpop.permute.xlu0 %261
    %264 = vrot.lane.b32.xlu0 %v256, 112
    %v265 = vpop.permute.xlu0 %264
    %267 = vrot.lane.b32.xlu0 %v256, 104
    %v268 = vpop.permute.xlu0 %267
    %271 = vrot.lane.b32.xlu0 %v258, 120
    %v272 = vpop.permute.xlu0 %271
    %274 = vrot.lane.b32.xlu0 %v258, 112
    %v275 = vpop.permute.xlu0 %274
    %277 = vrot.lane.b32.xlu0 %v258, 104
    %v278 = vpop.permute.xlu0 %277
    %v280 = vpack.c.bf16 %v256, %v256
    %v281 = vpack.c.bf16 %v262, %v262
    %v282 = vpack.c.bf16 %v265, %v265
    %v283 = vpack.c.bf16 %v268, %v268
    %v284 = vpack.c.bf16 %v258, %v258
    %v285 = vpack.c.bf16 %v272, %v272
    %v286 = vpack.c.bf16 %v275, %v275
    %v287 = vpack.c.bf16 %v278, %v278
    %v289 = vunpack.c.l.b16 %v280
    %v290 = vpack.c.b16 %v289, %v289
    %291 = vrot.lane.b32.xlu0 %v290, 96
    %v292 = vpop.permute.xlu0 %291
    %vm293 = vcmask 64512
    %v295 = vsel %vm293, %v280, 0
    %v298 = vsel %vm293, %v292, 0
    %300 = vmatpush.bf16.xpose.msra.mxu0 0
    %301 = vmatpush.bf16.xpose.msra.mxu0 0
    %302 = vmatpush.bf16.xpose.msra.mxu0 0
    %303 = vmatpush.bf16.xpose.msra.mxu0 0
    %304 = vmatpush.bf16.xpose.msra.mxu0 0
    %305 = vmatpush.bf16.xpose.msra.mxu0 0
    %306 = vmatpush.bf16.xpose.msra.mxu0 0
    %307 = vmatpush.bf16.xpose.msra.mxu0 %v298
    %308 = vmatmul.bf16.gmra.mxu0 %v295
    %v309 = vpop.f32.mrf.mxu0
    %v310 = vadd.f32 0.0, %v309
    %v311 = vpop.f32.mrf.mxu0
    %312 = vdwg.mxu0
    %v314 = vunpack.c.l.b16 %v281
    %v315 = vpack.c.b16 %v314, %v314
    %316 = vrot.lane.b32.xlu0 %v315, 96
    %v317 = vpop.permute.xlu0 %316
    %v319 = vsel %vm293, %v281, 0
    %v322 = vsel %vm293, %v317, 0
    %324 = vmatpush.bf16.xpose.msra.mxu0 0
    %325 = vmatpush.bf16.xpose.msra.mxu0 0
    %326 = vmatpush.bf16.xpose.msra.mxu0 0
    %327 = vmatpush.bf16.xpose.msra.mxu0 0
    %328 = vmatpush.bf16.xpose.msra.mxu0 0
    %329 = vmatpush.bf16.xpose.msra.mxu0 0
    %330 = vmatpush.bf16.xpose.msra.mxu0 0
    %331 = vmatpush.bf16.xpose.msra.mxu0 %v322
    %332 = vmatmul.bf16.gmra.mxu0 %v319
    %v333 = vpop.f32.mrf.mxu0
    %v334 = vadd.f32 0.0, %v333
    %v335 = vpop.f32.mrf.mxu0
    %336 = vdwg.mxu0
    %v338 = vunpack.c.l.b16 %v282
    %v339 = vpack.c.b16 %v338, %v338
    %340 = vrot.lane.b32.xlu0 %v339, 96
    %v341 = vpop.permute.xlu0 %340
    %v343 = vsel %vm293, %v282, 0
    %v346 = vsel %vm293, %v341, 0
    %348 = vmatpush.bf16.xpose.msra.mxu0 0
    %349 = vmatpush.bf16.xpose.msra.mxu0 0
    %350 = vmatpush.bf16.xpose.msra.mxu0 0
    %351 = vmatpush.bf16.xpose.msra.mxu0 0
    %352 = vmatpush.bf16.xpose.msra.mxu0 0
    %353 = vmatpush.bf16.xpose.msra.mxu0 0
    %354 = vmatpush.bf16.xpose.msra.mxu0 0
    %355 = vmatpush.bf16.xpose.msra.mxu0 %v346
    %356 = vmatmul.bf16.gmra.mxu0 %v343
    %v357 = vpop.f32.mrf.mxu0
    %v358 = vadd.f32 0.0, %v357
    %v359 = vpop.f32.mrf.mxu0
    %360 = vdwg.mxu0
    %v362 = vunpack.c.l.b16 %v283
    %v363 = vpack.c.b16 %v362, %v362
    %364 = vrot.lane.b32.xlu0 %v363, 96
    %v365 = vpop.permute.xlu0 %364
    %v367 = vsel %vm293, %v283, 0
    %v370 = vsel %vm293, %v365, 0
    %372 = vmatpush.bf16.xpose.msra.mxu0 0
    %373 = vmatpush.bf16.xpose.msra.mxu0 0
    %374 = vmatpush.bf16.xpose.msra.mxu0 0
    %375 = vmatpush.bf16.xpose.msra.mxu0 0
    %376 = vmatpush.bf16.xpose.msra.mxu0 0
    %377 = vmatpush.bf16.xpose.msra.mxu0 0
    %378 = vmatpush.bf16.xpose.msra.mxu0 0
    %379 = vmatpush.bf16.xpose.msra.mxu0 %v370
    %380 = vmatmul.bf16.gmra.mxu0 %v367
    %v381 = vpop.f32.mrf.mxu0
    %v382 = vadd.f32 0.0, %v381
    %v383 = vpop.f32.mrf.mxu0
    %384 = vdwg.mxu0
    %v386 = vunpack.c.l.b16 %v284
    %v387 = vpack.c.b16 %v386, %v386
    %388 = vrot.lane.b32.xlu0 %v387, 96
    %v389 = vpop.permute.xlu0 %388
    %v391 = vsel %vm293, %v284, 0
    %v394 = vsel %vm293, %v389, 0
    %396 = vmatpush.bf16.xpose.msra.mxu0 0
    %397 = vmatpush.bf16.xpose.msra.mxu0 0
    %398 = vmatpush.bf16.xpose.msra.mxu0 0
    %399 = vmatpush.bf16.xpose.msra.mxu0 0
    %400 = vmatpush.bf16.xpose.msra.mxu0 0
    %401 = vmatpush.bf16.xpose.msra.mxu0 0
    %402 = vmatpush.bf16.xpose.msra.mxu0 0
    %403 = vmatpush.bf16.xpose.msra.mxu0 %v394
    %404 = vmatmul.bf16.gmra.mxu0 %v391
    %v405 = vpop.f32.mrf.mxu0
    %v406 = vadd.f32 0.0, %v405
    %v407 = vpop.f32.mrf.mxu0
    %408 = vdwg.mxu0
    %v410 = vunpack.c.l.b16 %v285
    %v411 = vpack.c.b16 %v410, %v410
    %412 = vrot.lane.b32.xlu0 %v411, 96
    %v413 = vpop.permute.xlu0 %412
    %v415 = vsel %vm293, %v285, 0
    %v418 = vsel %vm293, %v413, 0
    %420 = vmatpush.bf16.xpose.msra.mxu0 0
    %421 = vmatpush.bf16.xpose.msra.mxu0 0
    %422 = vmatpush.bf16.xpose.msra.mxu0 0
    %423 = vmatpush.bf16.xpose.msra.mxu0 0
    %424 = vmatpush.bf16.xpose.msra.mxu0 0
    %425 = vmatpush.bf16.xpose.msra.mxu0 0
    %426 = vmatpush.bf16.xpose.msra.mxu0 0
    %427 = vmatpush.bf16.xpose.msra.mxu0 %v418
    %428 = vmatmul.bf16.gmra.mxu0 %v415
    %v429 = vpop.f32.mrf.mxu0
    %v430 = vadd.f32 0.0, %v429
    %v431 = vpop.f32.mrf.mxu0
    %432 = vdwg.mxu0
    %v434 = vunpack.c.l.b16 %v286
    %v435 = vpack.c.b16 %v434, %v434
    %436 = vrot.lane.b32.xlu0 %v435, 96
    %v437 = vpop.permute.xlu0 %436
    %v439 = vsel %vm293, %v286, 0
    %v442 = vsel %vm293, %v437, 0
    %444 = vmatpush.bf16.xpose.msra.mxu0 0
    %445 = vmatpush.bf16.xpose.msra.mxu0 0
    %446 = vmatpush.bf16.xpose.msra.mxu0 0
    %447 = vmatpush.bf16.xpose.msra.mxu0 0
    %448 = vmatpush.bf16.xpose.msra.mxu0 0
    %449 = vmatpush.bf16.xpose.msra.mxu0 0
    %450 = vmatpush.bf16.xpose.msra.mxu0 0
    %451 = vmatpush.bf16.xpose.msra.mxu0 %v442
    %452 = vmatmul.bf16.gmra.mxu0 %v439
    %v453 = vpop.f32.mrf.mxu0
    %v454 = vadd.f32 0.0, %v453
    %v455 = vpop.f32.mrf.mxu0
    %456 = vdwg.mxu0
    %v458 = vunpack.c.l.b16 %v287
    %v459 = vpack.c.b16 %v458, %v458
    %460 = vrot.lane.b32.xlu0 %v459, 96
    %v461 = vpop.permute.xlu0 %460
    %v463 = vsel %vm293, %v287, 0
    %v466 = vsel %vm293, %v461, 0
    %468 = vmatpush.bf16.xpose.msra.mxu0 0
    %469 = vmatpush.bf16.xpose.msra.mxu0 0
    %470 = vmatpush.bf16.xpose.msra.mxu0 0
    %471 = vmatpush.bf16.xpose.msra.mxu0 0
    %472 = vmatpush.bf16.xpose.msra.mxu0 0
    %473 = vmatpush.bf16.xpose.msra.mxu0 0
    %474 = vmatpush.bf16.xpose.msra.mxu0 0
    %475 = vmatpush.bf16.xpose.msra.mxu0 %v466
    %476 = vmatmul.bf16.gmra.mxu0 %v463
    %v477 = vpop.f32.mrf.mxu0
    %v478 = vadd.f32 0.0, %v477
    %v479 = vpop.f32.mrf.mxu0
    %480 = vdwg.mxu0
    %v481 = vsel %vm293, %v310, -inf
    %482 = vmax.xlane.f32.xlu0 %v481
    %v483 = vpop.xlane.xlu0 %482
    %v484 = vsel %vm293, %v334, -inf
    %485 = vmax.xlane.f32.xlu0 %v484
    %v486 = vpop.xlane.xlu0 %485
    %v487 = vsel %vm293, %v358, -inf
    %488 = vmax.xlane.f32.xlu0 %v487
    %v489 = vpop.xlane.xlu0 %488
    %v490 = vsel %vm293, %v382, -inf
    %491 = vmax.xlane.f32.xlu0 %v490
    %v492 = vpop.xlane.xlu0 %491
    %v493 = vsel %vm293, %v406, -inf
    %494 = vmax.xlane.f32.xlu0 %v493
    %v495 = vpop.xlane.xlu0 %494
    %v496 = vsel %vm293, %v430, -inf
    %497 = vmax.xlane.f32.xlu0 %v496
    %v498 = vpop.xlane.xlu0 %497
    %v499 = vsel %vm293, %v454, -inf
    %500 = vmax.xlane.f32.xlu0 %v499
    %v501 = vpop.xlane.xlu0 %500
    %v502 = vsel %vm293, %v478, -inf
    %503 = vmax.xlane.f32.xlu0 %v502
    %v504 = vpop.xlane.xlu0 %503
    %v505 = vsub.f32 %v310, %v483
    %v506 = vsub.f32 %v334, %v486
    %v507 = vsub.f32 %v358, %v489
    %v508 = vsub.f32 %v382, %v492
    %v509 = vsub.f32 %v406, %v495
    %v510 = vsub.f32 %v430, %v498
    %v511 = vsub.f32 %v454, %v501
    %v512 = vsub.f32 %v478, %v504
    %v513 = vmul.f32 %v505, 1.442695
    %v514 = vpow.pop %v513
    %v515 = vmul.f32 %v506, 1.442695
    %v516 = vpow.pop %v515
    %v517 = vmul.f32 %v507, 1.442695
    %v518 = vpow.pop %v517
    %v519 = vmul.f32 %v508, 1.442695
    %v520 = vpow.pop %v519
    %v521 = vmul.f32 %v509, 1.442695
    %v522 = vpow.pop %v521
    %v523 = vmul.f32 %v510, 1.442695
    %v524 = vpow.pop %v523
    %v525 = vmul.f32 %v511, 1.442695
    %v526 = vpow.pop %v525
    %v527 = vmul.f32 %v512, 1.442695
    %v528 = vpow.pop %v527
    %v529 = vsel %vm293, %v514, 0.0
    %530 = vadd.xlane.f32.xlu0 %v529
    %v531 = vpop.xlane.xlu0 %530
    %v532 = vsel %vm293, %v516, 0.0
    %533 = vadd.xlane.f32.xlu0 %v532
    %v534 = vpop.xlane.xlu0 %533
    %v535 = vsel %vm293, %v518, 0.0
    %536 = vadd.xlane.f32.xlu0 %v535
    %v537 = vpop.xlane.xlu0 %536
    %v538 = vsel %vm293, %v520, 0.0
    %539 = vadd.xlane.f32.xlu0 %v538
    %v540 = vpop.xlane.xlu0 %539
    %v541 = vsel %vm293, %v522, 0.0
    %542 = vadd.xlane.f32.xlu0 %v541
    %v543 = vpop.xlane.xlu0 %542
    %v544 = vsel %vm293, %v524, 0.0
    %545 = vadd.xlane.f32.xlu0 %v544
    %v546 = vpop.xlane.xlu0 %545
    %v547 = vsel %vm293, %v526, 0.0
    %548 = vadd.xlane.f32.xlu0 %v547
    %v549 = vpop.xlane.xlu0 %548
    %v550 = vsel %vm293, %v528, 0.0
    %551 = vadd.xlane.f32.xlu0 %v550
    %v552 = vpop.xlane.xlu0 %551
    %v553 = vrcp.pop %v531
    %v554 = vrcp.pop %v534
    %v555 = vrcp.pop %v537
    %v556 = vrcp.pop %v540
    %v557 = vrcp.pop %v543
    %v558 = vrcp.pop %v546
    %v559 = vrcp.pop %v549
    %v560 = vrcp.pop %v552
    %v561 = vmul.f32 %v514, %v553
    %v562 = vmul.f32 %v516, %v554
    %v563 = vmul.f32 %v518, %v555
    %v564 = vmul.f32 %v520, %v556
    %v565 = vmul.f32 %v522, %v557
    %v566 = vmul.f32 %v524, %v558
    %v567 = vmul.f32 %v526, %v559
    %v568 = vmul.f32 %v528, %v560
    %v569 = vpack.c.bf16 %v561, %v561
    %v570 = vpack.c.bf16 %v562, %v562
    %v571 = vpack.c.bf16 %v563, %v563
    %v572 = vpack.c.bf16 %v564, %v564
    %v573 = vpack.c.bf16 %v565, %v565
    %v574 = vpack.c.bf16 %v566, %v566
    %v575 = vpack.c.bf16 %v567, %v567
    %v576 = vpack.c.bf16 %v568, %v568
    %577 = vrot.lane.b32.xlu0 %v290, 64
    %v578 = vpop.permute.xlu0 %577
    %v580 = vsel %vm293, %v569, 0
    %vm582 = vcmask 1043456
    %v584 = vsel %vm582, %v578, 0
    %586 = vmatpush.bf16.msra.mxu0 0
    %587 = vmatpush.bf16.msra.mxu0 0
    %588 = vmatpush.bf16.msra.mxu0 0
    %589 = vmatpush.bf16.msra.mxu0 0
    %590 = vmatpush.bf16.msra.mxu0 0
    %591 = vmatpush.bf16.msra.mxu0 0
    %592 = vmatpush.bf16.msra.mxu0 0
    %593 = vmatpush.bf16.msra.mxu0 %v584
    %594 = vmatmul.bf16.gmra.mxu0 %v580
    %v595 = vpop.f32.mrf.mxu0
    %v596 = vadd.f32 0.0, %v595
    %v597 = vpop.f32.mrf.mxu0
    %598 = vdwg.mxu0
    %599 = vrot.lane.b32.xlu0 %v315, 64
    %v600 = vpop.permute.xlu0 %599
    %v602 = vsel %vm293, %v570, 0
    %v605 = vsel %vm582, %v600, 0
    %607 = vmatpush.bf16.msra.mxu0 0
    %608 = vmatpush.bf16.msra.mxu0 0
    %609 = vmatpush.bf16.msra.mxu0 0
    %610 = vmatpush.bf16.msra.mxu0 0
    %611 = vmatpush.bf16.msra.mxu0 0
    %612 = vmatpush.bf16.msra.mxu0 0
    %613 = vmatpush.bf16.msra.mxu0 0
    %614 = vmatpush.bf16.msra.mxu0 %v605
    %615 = vmatmul.bf16.gmra.mxu0 %v602
    %v616 = vpop.f32.mrf.mxu0
    %v617 = vadd.f32 0.0, %v616
    %v618 = vpop.f32.mrf.mxu0
    %619 = vdwg.mxu0
    %620 = vrot.lane.b32.xlu0 %v339, 64
    %v621 = vpop.permute.xlu0 %620
    %v623 = vsel %vm293, %v571, 0
    %v626 = vsel %vm582, %v621, 0
    %628 = vmatpush.bf16.msra.mxu0 0
    %629 = vmatpush.bf16.msra.mxu0 0
    %630 = vmatpush.bf16.msra.mxu0 0
    %631 = vmatpush.bf16.msra.mxu0 0
    %632 = vmatpush.bf16.msra.mxu0 0
    %633 = vmatpush.bf16.msra.mxu0 0
    %634 = vmatpush.bf16.msra.mxu0 0
    %635 = vmatpush.bf16.msra.mxu0 %v626
    %636 = vmatmul.bf16.gmra.mxu0 %v623
    %v637 = vpop.f32.mrf.mxu0
    %v638 = vadd.f32 0.0, %v637
    %v639 = vpop.f32.mrf.mxu0
    %640 = vdwg.mxu0
    %641 = vrot.lane.b32.xlu0 %v363, 64
    %v642 = vpop.permute.xlu0 %641
    %v644 = vsel %vm293, %v572, 0
    %v647 = vsel %vm582, %v642, 0
    %649 = vmatpush.bf16.msra.mxu0 0
    %650 = vmatpush.bf16.msra.mxu0 0
    %651 = vmatpush.bf16.msra.mxu0 0
    %652 = vmatpush.bf16.msra.mxu0 0
    %653 = vmatpush.bf16.msra.mxu0 0
    %654 = vmatpush.bf16.msra.mxu0 0
    %655 = vmatpush.bf16.msra.mxu0 0
    %656 = vmatpush.bf16.msra.mxu0 %v647
    %657 = vmatmul.bf16.gmra.mxu0 %v644
    %v658 = vpop.f32.mrf.mxu0
    %v659 = vadd.f32 0.0, %v658
    %v660 = vpop.f32.mrf.mxu0
    %661 = vdwg.mxu0
    %662 = vrot.lane.b32.xlu0 %v387, 64
    %v663 = vpop.permute.xlu0 %662
    %v665 = vsel %vm293, %v573, 0
    %v668 = vsel %vm582, %v663, 0
    %670 = vmatpush.bf16.msra.mxu0 0
    %671 = vmatpush.bf16.msra.mxu0 0
    %672 = vmatpush.bf16.msra.mxu0 0
    %673 = vmatpush.bf16.msra.mxu0 0
    %674 = vmatpush.bf16.msra.mxu0 0
    %675 = vmatpush.bf16.msra.mxu0 0
    %676 = vmatpush.bf16.msra.mxu0 0
    %677 = vmatpush.bf16.msra.mxu0 %v668
    %678 = vmatmul.bf16.gmra.mxu0 %v665
    %v679 = vpop.f32.mrf.mxu0
    %v680 = vadd.f32 0.0, %v679
    %v681 = vpop.f32.mrf.mxu0
    %682 = vdwg.mxu0
    %683 = vrot.lane.b32.xlu0 %v411, 64
    %v684 = vpop.permute.xlu0 %683
    %v686 = vsel %vm293, %v574, 0
    %v689 = vsel %vm582, %v684, 0
    %691 = vmatpush.bf16.msra.mxu0 0
    %692 = vmatpush.bf16.msra.mxu0 0
    %693 = vmatpush.bf16.msra.mxu0 0
    %694 = vmatpush.bf16.msra.mxu0 0
    %695 = vmatpush.bf16.msra.mxu0 0
    %696 = vmatpush.bf16.msra.mxu0 0
    %697 = vmatpush.bf16.msra.mxu0 0
    %698 = vmatpush.bf16.msra.mxu0 %v689
    %699 = vmatmul.bf16.gmra.mxu0 %v686
    %v700 = vpop.f32.mrf.mxu0
    %v701 = vadd.f32 0.0, %v700
    %v702 = vpop.f32.mrf.mxu0
    %703 = vdwg.mxu0
    %704 = vrot.lane.b32.xlu0 %v435, 64
    %v705 = vpop.permute.xlu0 %704
    %v707 = vsel %vm293, %v575, 0
    %v710 = vsel %vm582, %v705, 0
    %712 = vmatpush.bf16.msra.mxu0 0
    %713 = vmatpush.bf16.msra.mxu0 0
    %714 = vmatpush.bf16.msra.mxu0 0
    %715 = vmatpush.bf16.msra.mxu0 0
    %716 = vmatpush.bf16.msra.mxu0 0
    %717 = vmatpush.bf16.msra.mxu0 0
    %718 = vmatpush.bf16.msra.mxu0 0
    %719 = vmatpush.bf16.msra.mxu0 %v710
    %720 = vmatmul.bf16.gmra.mxu0 %v707
    %v721 = vpop.f32.mrf.mxu0
    %v722 = vadd.f32 0.0, %v721
    %v723 = vpop.f32.mrf.mxu0
    %724 = vdwg.mxu0
    %725 = vrot.lane.b32.xlu0 %v459, 64
    %v726 = vpop.permute.xlu0 %725
    %v728 = vsel %vm293, %v576, 0
    %v731 = vsel %vm582, %v726, 0
    %733 = vmatpush.bf16.msra.mxu0 0
    %734 = vmatpush.bf16.msra.mxu0 0
    %735 = vmatpush.bf16.msra.mxu0 0
    %736 = vmatpush.bf16.msra.mxu0 0
    %737 = vmatpush.bf16.msra.mxu0 0
    %738 = vmatpush.bf16.msra.mxu0 0
    %739 = vmatpush.bf16.msra.mxu0 0
    %740 = vmatpush.bf16.msra.mxu0 %v731
    %741 = vmatmul.bf16.gmra.mxu0 %v728
    %v742 = vpop.f32.mrf.mxu0
    %v743 = vadd.f32 0.0, %v742
    %v744 = vpop.f32.mrf.mxu0
    %745 = vdwg.mxu0
    %747 = vrot.lane.b32.xlu0 %v617, 8
    %v748 = vpop.permute.xlu0 %747
    %751 = vrot.lane.b32.xlu0 %v638, 16
    %v752 = vpop.permute.xlu0 %751
    %755 = vrot.lane.b32.xlu0 %v659, 24
    %v756 = vpop.permute.xlu0 %755
    %v758 = vsel %vm293, %v596, %v748
    %vm759 = vcmask 130048
    %v760 = vsel %vm759, %v758, %v752
    %vm761 = vcmask 195584
    %v762 = vsel %vm761, %v760, %v756
    %764 = vrot.lane.b32.xlu0 %v701, 8
    %v765 = vpop.permute.xlu0 %764
    %768 = vrot.lane.b32.xlu0 %v722, 16
    %v769 = vpop.permute.xlu0 %768
    %772 = vrot.lane.b32.xlu0 %v743, 24
    %v773 = vpop.permute.xlu0 %772
    %v775 = vsel %vm293, %v680, %v765
    %v776 = vsel %vm759, %v775, %v769
    %v777 = vsel %vm761, %v776, %v773
    %v778 = vpack.c.bf16 %v777, %v762
    %v779 = vld [vmem:[%s5] sm:$0xf]
    %v780 = vld [vmem:[%s5 + $0x4] sm:$0xf]
    %v781 = vld [vmem:[%s5 + $0x8] sm:$0xf]
    %v782 = vld [vmem:[%s5 + $0xc] sm:$0xf]
    %v783 = vld [vmem:[%s6] sm:$0x1]
    %v785 = vperm.slane %v783, 0
    %v791 = vunpack.c.l.b16 %v779
    %v792 = vunpack.c.l.b16 %v780
    %v793 = vunpack.c.l.b16 %v781
    %v794 = vunpack.c.l.b16 %v782
    %v795 = vpack.c.b16 %v792, %v791
    %v796 = vpack.c.b16 %v794, %v793
    %v800 = vsel %vm160, %v778, 0
    %802 = vmatpush.bf16.msra.mxu0 0
    %803 = vmatpush.bf16.msra.mxu0 0
    %804 = vmatpush.bf16.msra.mxu0 0
    %805 = vmatpush.bf16.msra.mxu0 0
    %806 = vmatpush.bf16.msra.mxu0 0
    %807 = vmatpush.bf16.msra.mxu0 0
    %808 = vmatpush.bf16.msra.mxu0 %v796
    %809 = vmatpush.bf16.msra.mxu0 %v795
    %810 = vmatmul.bf16.gmra.mxu0 %v800
    %v811 = vpop.f32.mrf.mxu0
    %v812 = vadd.f32 %v785, %v811
    %v813 = vpop.f32.mrf.mxu0
    %v814 = vadd.f32 %v785, %v813
    %815 = vdwg.mxu0
    %v816 = vadd.f32 %v812, %v220
    %v817 = vadd.f32 %v814, %v221
    %v818 = vld [vmem:[#allocation7] sm:$0x1]
    %v819 = vld [vmem:[%s8] sm:$0x1]
    %v820 = vsel %vm160, %v816, 0.0
    %821 = vadd.xlane.f32.xlu0 %v820
    %v822 = vpop.xlane.xlu0 %821
    %v823 = vsel %vm160, %v817, 0.0
    %824 = vadd.xlane.f32.xlu0 %v823
    %v825 = vpop.xlane.xlu0 %824
    %v826 = vmul.f32 %v822, %v173
    %v827 = vmul.f32 %v825, %v173
    %v828 = vsub.f32 %v816, %v826
    %v829 = vsub.f32 %v817, %v827
    %v830 = vmul.f32 %v828, %v828
    %v831 = vmul.f32 %v829, %v829
    %v832 = vsel %vm160, %v830, 0.0
    %833 = vadd.xlane.f32.xlu0 %v832
    %v834 = vpop.xlane.xlu0 %833
    %v835 = vsel %vm160, %v831, 0.0
    %836 = vadd.xlane.f32.xlu0 %v835
    %v837 = vpop.xlane.xlu0 %836
    %v838 = vmul.f32 %v834, %v173
    %v839 = vmul.f32 %v837, %v173
    %v840 = vadd.f32 %v838, 1e-12
    %v841 = vadd.f32 %v839, 1e-12
    %v842 = vrsqrt.pop %v840
    %v843 = vmul.f32 %v842, %v840
    %v844 = vmul.f32 %v843, %v842
    %v845 = vmul.f32 0.5, %v844
    %v846 = vsub.f32 1.5, %v845
    %v847 = vmul.f32 %v842, %v846
    %vm848 = vweird.f32 %v840
    %vm849 = vweird.f32 %v842
    %vm850 = vmor %vm848, %vm849
    %v851 = vsel %vm850, %v842, %v847
    %v852 = vrsqrt.pop %v841
    %v853 = vmul.f32 %v852, %v841
    %v854 = vmul.f32 %v853, %v852
    %v855 = vmul.f32 0.5, %v854
    %v856 = vsub.f32 1.5, %v855
    %v857 = vmul.f32 %v852, %v856
    %vm858 = vweird.f32 %v841
    %vm859 = vweird.f32 %v852
    %vm860 = vmor %vm858, %vm859
    %v861 = vsel %vm860, %v852, %v857
    %v862 = vmul.f32 %v828, %v851
    %v863 = vmul.f32 %v829, %v861
    %v865 = vperm.slane %v818, 0
    %v867 = vmul.f32 %v862, %v865
    %v868 = vmul.f32 %v863, %v865
    %v870 = vperm.slane %v819, 0
    %v872 = vadd.f32 %v867, %v870
    %v873 = vadd.f32 %v868, %v870
    %v874 = vpack.c.bf16 %v873, %v872
    %v875 = vld [vmem:[%s9] sm:$0xf]
    %v876 = vld [vmem:[%s9 + $0x4] sm:$0xf]
    %v877 = vld [vmem:[%s9 + $0x8] sm:$0xf]
    %v878 = vld [vmem:[%s9 + $0xc] sm:$0xf]
    %v879 = vld [vmem:[%s10] sm:$0x1]
    %v881 = vperm.slane %v879, 0
    %v887 = vunpack.c.l.b16 %v875
    %v888 = vunpack.c.l.b16 %v876
    %v889 = vunpack.c.l.b16 %v877
    %v890 = vunpack.c.l.b16 %v878
    %v891 = vpack.c.b16 %v888, %v887
    %v892 = vpack.c.b16 %v890, %v889
    %v896 = vsel %vm160, %v874, 0
    %898 = vmatpush.bf16.msra.mxu0 0
    %899 = vmatpush.bf16.msra.mxu0 0
    %900 = vmatpush.bf16.msra.mxu0 0
    %901 = vmatpush.bf16.msra.mxu0 0
    %902 = vmatpush.bf16.msra.mxu0 0
    %903 = vmatpush.bf16.msra.mxu0 0
    %904 = vmatpush.bf16.msra.mxu0 %v892
    %905 = vmatpush.bf16.msra.mxu0 %v891
    %906 = vmatmul.bf16.gmra.mxu0 %v896
    %v907 = vpop.f32.mrf.mxu0
    %v908 = vadd.f32 %v881, %v907
    %v909 = vpop.f32.mrf.mxu0
    %v910 = vadd.f32 %v881, %v909
    %911 = vdwg.mxu0
    %v912 = vmul.f32 %v908, %v908
    %v913 = vmul.f32 %v910, %v910
    %v914 = vmul.f32 %v908, %v912
    %v915 = vmul.f32 %v910, %v913
    %v916 = vmul.f32 %v914, 0.044715
    %v917 = vmul.f32 %v915, 0.044715
    %v918 = vadd.f32 %v908, %v916
    %v919 = vadd.f32 %v910, %v917
    %v920 = vmul.f32 %v918, 0.7978846
    %v921 = vmul.f32 %v919, 0.7978846
    %v922 = vtanh.pop %v920
    %v923 = vtanh.pop %v921
    %v924 = vadd.f32 %v922, 1.0
    %v925 = vadd.f32 %v923, 1.0
    %v926 = vmul.f32 %v924, 0.5
    %v927 = vmul.f32 %v925, 0.5
    %v928 = vmul.f32 %v908, %v926
    %v929 = vmul.f32 %v910, %v927
    %v930 = vpack.c.bf16 %v929, %v928
    %v931 = vld [vmem:[%s11] sm:$0xf]
    %v932 = vld [vmem:[%s11 + $0x4] sm:$0xf]
    %v933 = vld [vmem:[%s11 + $0x8] sm:$0xf]
    %v934 = vld [vmem:[%s11 + $0xc] sm:$0xf]
    %v935 = vld [vmem:[%s11 + $0x10] sm:$0xf]
    %v936 = vld [vmem:[%s11 + $0x14] sm:$0xf]
    %v937 = vld [vmem:[%s11 + $0x18] sm:$0xf]
    %v938 = vld [vmem:[%s11 + $0x1c] sm:$0xf]
    %v939 = vld [vmem:[%s12] sm:$0x1]
    %v941 = vperm.slane %v939, 0
    %v951 = vunpack.c.l.b16 %v931
    %v952 = vunpack.c.l.b16 %v932
    %v953 = vunpack.c.l.b16 %v933
    %v954 = vunpack.c.l.b16 %v934
    %v955 = vunpack.c.l.b16 %v935
    %v956 = vunpack.c.l.b16 %v936
    %v957 = vunpack.c.l.b16 %v937
    %v958 = vunpack.c.l.b16 %v938
    %v959 = vpack.c.b16 %v952, %v951
    %v960 = vpack.c.b16 %v954, %v953
    %v961 = vpack.c.b16 %v956, %v955
    %v962 = vpack.c.b16 %v958, %v957
    %vm967 = vcmask 523264
    %v969 = vsel %vm967, %v930, 0
    %971 = vmatpush.bf16.msra.mxu0 0
    %972 = vmatpush.bf16.msra.mxu0 0
    %973 = vmatpush.bf16.msra.mxu0 0
    %974 = vmatpush.bf16.msra.mxu0 0
    %975 = vmatpush.bf16.msra.mxu0 %v962
    %976 = vmatpush.bf16.msra.mxu0 %v961
    %977 = vmatpush.bf16.msra.mxu0 %v960
    %978 = vmatpush.bf16.msra.mxu0 %v959
    %979 = vmatmul.bf16.gmra.mxu0 %v969
    %v980 = vpop.f32.mrf.mxu0
    %v981 = vadd.f32 %v941, %v980
    %v982 = vpop.f32.mrf.mxu0
    %v983 = vadd.f32 %v941, %v982
    %984 = vdwg.mxu0
    %v985 = vadd.f32 %v981, %v872
    %v986 = vadd.f32 %v983, %v873
    %v987 = vld [vmem:[#allocation8] sm:$0x1]
    %v988 = vld [vmem:[%s14] sm:$0x1]
    %v989 = vsel %vm160, %v985, 0.0
    %990 = vadd.xlane.f32.xlu0 %v989
    %v991 = vpop.xlane.xlu0 %990
    %v992 = vsel %vm160, %v986, 0.0
    %993 = vadd.xlane.f32.xlu0 %v992
    %v994 = vpop.xlane.xlu0 %993
    %v995 = vmul.f32 %v991, %v173
    %v996 = vmul.f32 %v994, %v173
    %v997 = vsub.f32 %v985, %v995
    %v998 = vsub.f32 %v986, %v996
    %v999 = vmul.f32 %v997, %v997
    %v1000 = vmul.f32 %v998, %v998
    %v1001 = vsel %vm160, %v999, 0.0
    %1002 = vadd.xlane.f32.xlu0 %v1001
    %v1003 = vpop.xlane.xlu0 %1002
    %v1004 = vsel %vm160, %v1000, 0.0
    %1005 = vadd.xlane.f32.xlu0 %v1004
    %v1006 = vpop.xlane.xlu0 %1005
    %v1007 = vmul.f32 %v1003, %v173
    %v1008 = vmul.f32 %v1006, %v173
    %v1009 = vadd.f32 %v1007, 1e-12
    %v1010 = vadd.f32 %v1008, 1e-12
    %v1011 = vrsqrt.pop %v1009
    %v1012 = vmul.f32 %v1011, %v1009
    %v1013 = vmul.f32 %v1012, %v1011
    %v1014 = vmul.f32 0.5, %v1013
    %v1015 = vsub.f32 1.5, %v1014
    %v1016 = vmul.f32 %v1011, %v1015
    %vm1017 = vweird.f32 %v1009
    %vm1018 = vweird.f32 %v1011
    %vm1019 = vmor %vm1017, %vm1018
    %v1020 = vsel %vm1019, %v1011, %v1016
    %v1021 = vrsqrt.pop %v1010
    %v1022 = vmul.f32 %v1021, %v1010
    %v1023 = vmul.f32 %v1022, %v1021
    %v1024 = vmul.f32 0.5, %v1023
    %v1025 = vsub.f32 1.5, %v1024
    %v1026 = vmul.f32 %v1021, %v1025
    %vm1027 = vweird.f32 %v1010
    %vm1028 = vweird.f32 %v1021
    %vm1029 = vmor %vm1027, %vm1028
    %v1030 = vsel %vm1029, %v1021, %v1026
    %v1031 = vmul.f32 %v997, %v1020
    %v1032 = vmul.f32 %v998, %v1030
    %v1034 = vperm.slane %v987, 0
    %v1036 = vmul.f32 %v1031, %v1034
    %v1037 = vmul.f32 %v1032, %v1034
    %v1039 = vperm.slane %v988, 0
    %v1041 = vadd.f32 %v1036, %v1039
    %v1042 = vadd.f32 %v1037, %v1039
    %v1043 = vpack.c.bf16 %v1042, %v1041
    %s1044 = scalar_lea.vmem %s3, 16
    %v1045 = vld [vmem:[%s1044] sm:$0xf]
    %v1046 = vld [vmem:[%s1044 + $0x4] sm:$0xf]
    %v1047 = vld [vmem:[%s1044 + $0x8] sm:$0xf]
    %v1048 = vld [vmem:[%s1044 + $0xc] sm:$0xf]
    %s1049 = scalar_lea.vmem %s4, 1
    %v1050 = vld [vmem:[%s1049] sm:$0x1]
    %v1052 = vperm.slane %v1050, 0
    %v1058 = vunpack.c.l.b16 %v1045
    %v1059 = vunpack.c.l.b16 %v1046
    %v1060 = vunpack.c.l.b16 %v1047
    %v1061 = vunpack.c.l.b16 %v1048
    %v1062 = vpack.c.b16 %v1059, %v1058
    %v1063 = vpack.c.b16 %v1061, %v1060
    %v1067 = vsel %vm160, %v1043, 0
    %1069 = vmatpush.bf16.msra.mxu0 0
    %1070 = vmatpush.bf16.msra.mxu0 0
    %1071 = vmatpush.bf16.msra.mxu0 0
    %1072 = vmatpush.bf16.msra.mxu0 0
    %1073 = vmatpush.bf16.msra.mxu0 0
    %1074 = vmatpush.bf16.msra.mxu0 0
    %1075 = vmatpush.bf16.msra.mxu0 %v1063
    %1076 = vmatpush.bf16.msra.mxu0 %v1062
    %1077 = vmatmul.bf16.gmra.mxu0 %v1067
    %v1078 = vpop.f32.mrf.mxu0
    %v1079 = vadd.f32 %v1052, %v1078
    %v1080 = vpop.f32.mrf.mxu0
    %v1081 = vadd.f32 %v1052, %v1080
    %1082 = vdwg.mxu0
    %1084 = vrot.lane.b32.xlu0 %v1079, 120
    %v1085 = vpop.permute.xlu0 %1084
    %1087 = vrot.lane.b32.xlu0 %v1079, 112
    %v1088 = vpop.permute.xlu0 %1087
    %1090 = vrot.lane.b32.xlu0 %v1079, 104
    %v1091 = vpop.permute.xlu0 %1090
    %1094 = vrot.lane.b32.xlu0 %v1081, 120
    %v1095 = vpop.permute.xlu0 %1094
    %1097 = vrot.lane.b32.xlu0 %v1081, 112
    %v1098 = vpop.permute.xlu0 %1097
    %1100 = vrot.lane.b32.xlu0 %v1081, 104
    %v1101 = vpop.permute.xlu0 %1100
    %v1103 = vpack.c.bf16 %v1079, %v1079
    %v1104 = vpack.c.bf16 %v1085, %v1085
    %v1105 = vpack.c.bf16 %v1088, %v1088
    %v1106 = vpack.c.bf16 %v1091, %v1091
    %v1107 = vpack.c.bf16 %v1081, %v1081
    %v1108 = vpack.c.bf16 %v1095, %v1095
    %v1109 = vpack.c.bf16 %v1098, %v1098
    %v1110 = vpack.c.bf16 %v1101, %v1101
    %v1112 = vunpack.c.l.b16 %v1103
    %v1113 = vpack.c.b16 %v1112, %v1112
    %1114 = vrot.lane.b32.xlu0 %v1113, 96
    %v1115 = vpop.permute.xlu0 %1114
    %v1117 = vsel %vm293, %v1103, 0
    %v1120 = vsel %vm293, %v1115, 0
    %1122 = vmatpush.bf16.xpose.msra.mxu0 0
    %1123 = vmatpush.bf16.xpose.msra.mxu0 0
    %1124 = vmatpush.bf16.xpose.msra.mxu0 0
    %1125 = vmatpush.bf16.xpose.msra.mxu0 0
    %1126 = vmatpush.bf16.xpose.msra.mxu0 0
    %1127 = vmatpush.bf16.xpose.msra.mxu0 0
    %1128 = vmatpush.bf16.xpose.msra.mxu0 0
    %1129 = vmatpush.bf16.xpose.msra.mxu0 %v1120
    %1130 = vmatmul.bf16.gmra.mxu0 %v1117
    %v1131 = vpop.f32.mrf.mxu0
    %v1132 = vadd.f32 0.0, %v1131
    %v1133 = vpop.f32.mrf.mxu0
    %1134 = vdwg.mxu0
    %v1136 = vunpack.c.l.b16 %v1104
    %v1137 = vpack.c.b16 %v1136, %v1136
    %1138 = vrot.lane.b32.xlu0 %v1137, 96
    %v1139 = vpop.permute.xlu0 %1138
    %v1141 = vsel %vm293, %v1104, 0
    %v1144 = vsel %vm293, %v1139, 0
    %1146 = vmatpush.bf16.xpose.msra.mxu0 0
    %1147 = vmatpush.bf16.xpose.msra.mxu0 0
    %1148 = vmatpush.bf16.xpose.msra.mxu0 0
    %1149 = vmatpush.bf16.xpose.msra.mxu0 0
    %1150 = vmatpush.bf16.xpose.msra.mxu0 0
    %1151 = vmatpush.bf16.xpose.msra.mxu0 0
    %1152 = vmatpush.bf16.xpose.msra.mxu0 0
    %1153 = vmatpush.bf16.xpose.msra.mxu0 %v1144
    %1154 = vmatmul.bf16.gmra.mxu0 %v1141
    %v1155 = vpop.f32.mrf.mxu0
    %v1156 = vadd.f32 0.0, %v1155
    %v1157 = vpop.f32.mrf.mxu0
    %1158 = vdwg.mxu0
    %v1160 = vunpack.c.l.b16 %v1105
    %v1161 = vpack.c.b16 %v1160, %v1160
    %1162 = vrot.lane.b32.xlu0 %v1161, 96
    %v1163 = vpop.permute.xlu0 %1162
    %v1165 = vsel %vm293, %v1105, 0
    %v1168 = vsel %vm293, %v1163, 0
    %1170 = vmatpush.bf16.xpose.msra.mxu0 0
    %1171 = vmatpush.bf16.xpose.msra.mxu0 0
    %1172 = vmatpush.bf16.xpose.msra.mxu0 0
    %1173 = vmatpush.bf16.xpose.msra.mxu0 0
    %1174 = vmatpush.bf16.xpose.msra.mxu0 0
    %1175 = vmatpush.bf16.xpose.msra.mxu0 0
    %1176 = vmatpush.bf16.xpose.msra.mxu0 0
    %1177 = vmatpush.bf16.xpose.msra.mxu0 %v1168
    %1178 = vmatmul.bf16.gmra.mxu0 %v1165
    %v1179 = vpop.f32.mrf.mxu0
    %v1180 = vadd.f32 0.0, %v1179
    %v1181 = vpop.f32.mrf.mxu0
    %1182 = vdwg.mxu0
    %v1184 = vunpack.c.l.b16 %v1106
    %v1185 = vpack.c.b16 %v1184, %v1184
    %1186 = vrot.lane.b32.xlu0 %v1185, 96
    %v1187 = vpop.permute.xlu0 %1186
    %v1189 = vsel %vm293, %v1106, 0
    %v1192 = vsel %vm293, %v1187, 0
    %1194 = vmatpush.bf16.xpose.msra.mxu0 0
    %1195 = vmatpush.bf16.xpose.msra.mxu0 0
    %1196 = vmatpush.bf16.xpose.msra.mxu0 0
    %1197 = vmatpush.bf16.xpose.msra.mxu0 0
    %1198 = vmatpush.bf16.xpose.msra.mxu0 0
    %1199 = vmatpush.bf16.xpose.msra.mxu0 0
    %1200 = vmatpush.bf16.xpose.msra.mxu0 0
    %1201 = vmatpush.bf16.xpose.msra.mxu0 %v1192
    %1202 = vmatmul.bf16.gmra.mxu0 %v1189
    %v1203 = vpop.f32.mrf.mxu0
    %v1204 = vadd.f32 0.0, %v1203
    %v1205 = vpop.f32.mrf.mxu0
    %1206 = vdwg.mxu0
    %v1208 = vunpack.c.l.b16 %v1107
    %v1209 = vpack.c.b16 %v1208, %v1208
    %1210 = vrot.lane.b32.xlu0 %v1209, 96
    %v1211 = vpop.permute.xlu0 %1210
    %v1213 = vsel %vm293, %v1107, 0
    %v1216 = vsel %vm293, %v1211, 0
    %1218 = vmatpush.bf16.xpose.msra.mxu0 0
    %1219 = vmatpush.bf16.xpose.msra.mxu0 0
    %1220 = vmatpush.bf16.xpose.msra.mxu0 0
    %1221 = vmatpush.bf16.xpose.msra.mxu0 0
    %1222 = vmatpush.bf16.xpose.msra.mxu0 0
    %1223 = vmatpush.bf16.xpose.msra.mxu0 0
    %1224 = vmatpush.bf16.xpose.msra.mxu0 0
    %1225 = vmatpush.bf16.xpose.msra.mxu0 %v1216
    %1226 = vmatmul.bf16.gmra.mxu0 %v1213
    %v1227 = vpop.f32.mrf.mxu0
    %v1228 = vadd.f32 0.0, %v1227
    %v1229 = vpop.f32.mrf.mxu0
    %1230 = vdwg.mxu0
    %v1232 = vunpack.c.l.b16 %v1108
    %v1233 = vpack.c.b16 %v1232, %v1232
    %1234 = vrot.lane.b32.xlu0 %v1233, 96
    %v1235 = vpop.permute.xlu0 %1234
    %v1237 = vsel %vm293, %v1108, 0
    %v1240 = vsel %vm293, %v1235, 0
    %1242 = vmatpush.bf16.xpose.msra.mxu0 0
    %1243 = vmatpush.bf16.xpose.msra.mxu0 0
    %1244 = vmatpush.bf16.xpose.msra.mxu0 0
    %1245 = vmatpush.bf16.xpose.msra.mxu0 0
    %1246 = vmatpush.bf16.xpose.msra.mxu0 0
    %1247 = vmatpush.bf16.xpose.msra.mxu0 0
    %1248 = vmatpush.bf16.xpose.msra.mxu0 0
    %1249 = vmatpush.bf16.xpose.msra.mxu0 %v1240
    %1250 = vmatmul.bf16.gmra.mxu0 %v1237
    %v1251 = vpop.f32.mrf.mxu0
    %v1252 = vadd.f32 0.0, %v1251
    %v1253 = vpop.f32.mrf.mxu0
    %1254 = vdwg.mxu0
    %v1256 = vunpack.c.l.b16 %v1109
    %v1257 = vpack.c.b16 %v1256, %v1256
    %1258 = vrot.lane.b32.xlu0 %v1257, 96
    %v1259 = vpop.permute.xlu0 %1258
    %v1261 = vsel %vm293, %v1109, 0
    %v1264 = vsel %vm293, %v1259, 0
    %1266 = vmatpush.bf16.xpose.msra.mxu0 0
    %1267 = vmatpush.bf16.xpose.msra.mxu0 0
    %1268 = vmatpush.bf16.xpose.msra.mxu0 0
    %1269 = vmatpush.bf16.xpose.msra.mxu0 0
    %1270 = vmatpush.bf16.xpose.msra.mxu0 0
    %1271 = vmatpush.bf16.xpose.msra.mxu0 0
    %1272 = vmatpush.bf16.xpose.msra.mxu0 0
    %1273 = vmatpush.bf16.xpose.msra.mxu0 %v1264
    %1274 = vmatmul.bf16.gmra.mxu0 %v1261
    %v1275 = vpop.f32.mrf.mxu0
    %v1276 = vadd.f32 0.0, %v1275
    %v1277 = vpop.f32.mrf.mxu0
    %1278 = vdwg.mxu0
    %v1280 = vunpack.c.l.b16 %v1110
    %v1281 = vpack.c.b16 %v1280, %v1280
    %1282 = vrot.lane.b32.xlu0 %v1281, 96
    %v1283 = vpop.permute.xlu0 %1282
    %v1285 = vsel %vm293, %v1110, 0
    %v1288 = vsel %vm293, %v1283, 0
    %1290 = vmatpush.bf16.xpose.msra.mxu0 0
    %1291 = vmatpush.bf16.xpose.msra.mxu0 0
    %1292 = vmatpush.bf16.xpose.msra.mxu0 0
    %1293 = vmatpush.bf16.xpose.msra.mxu0 0
    %1294 = vmatpush.bf16.xpose.msra.mxu0 0
    %1295 = vmatpush.bf16.xpose.msra.mxu0 0
    %1296 = vmatpush.bf16.xpose.msra.mxu0 0
    %1297 = vmatpush.bf16.xpose.msra.mxu0 %v1288
    %1298 = vmatmul.bf16.gmra.mxu0 %v1285
    %v1299 = vpop.f32.mrf.mxu0
    %v1300 = vadd.f32 0.0, %v1299
    %v1301 = vpop.f32.mrf.mxu0
    %1302 = vdwg.mxu0
    %v1303 = vsel %vm293, %v1132, -inf
    %1304 = vmax.xlane.f32.xlu0 %v1303
    %v1305 = vpop.xlane.xlu0 %1304
    %v1306 = vsel %vm293, %v1156, -inf
    %1307 = vmax.xlane.f32.xlu0 %v1306
    %v1308 = vpop.xlane.xlu0 %1307
    %v1309 = vsel %vm293, %v1180, -inf
    %1310 = vmax.xlane.f32.xlu0 %v1309
    %v1311 = vpop.xlane.xlu0 %1310
    %v1312 = vsel %vm293, %v1204, -inf
    %1313 = vmax.xlane.f32.xlu0 %v1312
    %v1314 = vpop.xlane.xlu0 %1313
    %v1315 = vsel %vm293, %v1228, -inf
    %1316 = vmax.xlane.f32.xlu0 %v1315
    %v1317 = vpop.xlane.xlu0 %1316
    %v1318 = vsel %vm293, %v1252, -inf
    %1319 = vmax.xlane.f32.xlu0 %v1318
    %v1320 = vpop.xlane.xlu0 %1319
    %v1321 = vsel %vm293, %v1276, -inf
    %1322 = vmax.xlane.f32.xlu0 %v1321
    %v1323 = vpop.xlane.xlu0 %1322
    %v1324 = vsel %vm293, %v1300, -inf
    %1325 = vmax.xlane.f32.xlu0 %v1324
    %v1326 = vpop.xlane.xlu0 %1325
    %v1327 = vsub.f32 %v1132, %v1305
    %v1328 = vsub.f32 %v1156, %v1308
    %v1329 = vsub.f32 %v1180, %v1311
    %v1330 = vsub.f32 %v1204, %v1314
    %v1331 = vsub.f32 %v1228, %v1317
    %v1332 = vsub.f32 %v1252, %v1320
    %v1333 = vsub.f32 %v1276, %v1323
    %v1334 = vsub.f32 %v1300, %v1326
    %v1335 = vmul.f32 %v1327, 1.442695
    %v1336 = vpow.pop %v1335
    %v1337 = vmul.f32 %v1328, 1.442695
    %v1338 = vpow.pop %v1337
    %v1339 = vmul.f32 %v1329, 1.442695
    %v1340 = vpow.pop %v1339
    %v1341 = vmul.f32 %v1330, 1.442695
    %v1342 = vpow.pop %v1341
    %v1343 = vmul.f32 %v1331, 1.442695
    %v1344 = vpow.pop %v1343
    %v1345 = vmul.f32 %v1332, 1.442695
    %v1346 = vpow.pop %v1345
    %v1347 = vmul.f32 %v1333, 1.442695
    %v1348 = vpow.pop %v1347
    %v1349 = vmul.f32 %v1334, 1.442695
    %v1350 = vpow.pop %v1349
    %v1351 = vsel %vm293, %v1336, 0.0
    %1352 = vadd.xlane.f32.xlu0 %v1351
    %v1353 = vpop.xlane.xlu0 %1352
    %v1354 = vsel %vm293, %v1338, 0.0
    %1355 = vadd.xlane.f32.xlu0 %v1354
    %v1356 = vpop.xlane.xlu0 %1355
    %v1357 = vsel %vm293, %v1340, 0.0
    %1358 = vadd.xlane.f32.xlu0 %v1357
    %v1359 = vpop.xlane.xlu0 %1358
    %v1360 = vsel %vm293, %v1342, 0.0
    %1361 = vadd.xlane.f32.xlu0 %v1360
    %v1362 = vpop.xlane.xlu0 %1361
    %v1363 = vsel %vm293, %v1344, 0.0
    %1364 = vadd.xlane.f32.xlu0 %v1363
    %v1365 = vpop.xlane.xlu0 %1364
    %v1366 = vsel %vm293, %v1346, 0.0
    %1367 = vadd.xlane.f32.xlu0 %v1366
    %v1368 = vpop.xlane.xlu0 %1367
    %v1369 = vsel %vm293, %v1348, 0.0
    %1370 = vadd.xlane.f32.xlu0 %v1369
    %v1371 = vpop.xlane.xlu0 %1370
    %v1372 = vsel %vm293, %v1350, 0.0
    %1373 = vadd.xlane.f32.xlu0 %v1372
    %v1374 = vpop.xlane.xlu0 %1373
    %v1375 = vrcp.pop %v1353
    %v1376 = vrcp.pop %v1356
    %v1377 = vrcp.pop %v1359
    %v1378 = vrcp.pop %v1362
    %v1379 = vrcp.pop %v1365
    %v1380 = vrcp.pop %v1368
    %v1381 = vrcp.pop %v1371
    %v1382 = vrcp.pop %v1374
    %v1383 = vmul.f32 %v1336, %v1375
    %v1384 = vmul.f32 %v1338, %v1376
    %v1385 = vmul.f32 %v1340, %v1377
    %v1386 = vmul.f32 %v1342, %v1378
    %v1387 = vmul.f32 %v1344, %v1379
    %v1388 = vmul.f32 %v1346, %v1380
    %v1389 = vmul.f32 %v1348, %v1381
    %v1390 = vmul.f32 %v1350, %v1382
    %v1391 = vpack.c.bf16 %v1383, %v1383
    %v1392 = vpack.c.bf16 %v1384, %v1384
    %v1393 = vpack.c.bf16 %v1385, %v1385
    %v1394 = vpack.c.bf16 %v1386, %v1386
    %v1395 = vpack.c.bf16 %v1387, %v1387
    %v1396 = vpack.c.bf16 %v1388, %v1388
    %v1397 = vpack.c.bf16 %v1389, %v1389
    %v1398 = vpack.c.bf16 %v1390, %v1390
    %1399 = vrot.lane.b32.xlu0 %v1113, 64
    %v1400 = vpop.permute.xlu0 %1399
    %v1402 = vsel %vm293, %v1391, 0
    %v1405 = vsel %vm582, %v1400, 0
    %1407 = vmatpush.bf16.msra.mxu0 0
    %1408 = vmatpush.bf16.msra.mxu0 0
    %1409 = vmatpush.bf16.msra.mxu0 0
    %1410 = vmatpush.bf16.msra.mxu0 0
    %1411 = vmatpush.bf16.msra.mxu0 0
    %1412 = vmatpush.bf16.msra.mxu0 0
    %1413 = vmatpush.bf16.msra.mxu0 0
    %1414 = vmatpush.bf16.msra.mxu0 %v1405
    %1415 = vmatmul.bf16.gmra.mxu0 %v1402
    %v1416 = vpop.f32.mrf.mxu0
    %v1417 = vadd.f32 0.0, %v1416
    %v1418 = vpop.f32.mrf.mxu0
    %1419 = vdwg.mxu0
    %1420 = vrot.lane.b32.xlu0 %v1137, 64
    %v1421 = vpop.permute.xlu0 %1420
    %v1423 = vsel %vm293, %v1392, 0
    %v1426 = vsel %vm582, %v1421, 0
    %1428 = vmatpush.bf16.msra.mxu0 0
    %1429 = vmatpush.bf16.msra.mxu0 0
    %1430 = vmatpush.bf16.msra.mxu0 0
    %1431 = vmatpush.bf16.msra.mxu0 0
    %1432 = vmatpush.bf16.msra.mxu0 0
    %1433 = vmatpush.bf16.msra.mxu0 0
    %1434 = vmatpush.bf16.msra.mxu0 0
    %1435 = vmatpush.bf16.msra.mxu0 %v1426
    %1436 = vmatmul.bf16.gmra.mxu0 %v1423
    %v1437 = vpop.f32.mrf.mxu0
    %v1438 = vadd.f32 0.0, %v1437
    %v1439 = vpop.f32.mrf.mxu0
    %1440 = vdwg.mxu0
    %1441 = vrot.lane.b32.xlu0 %v1161, 64
    %v1442 = vpop.permute.xlu0 %1441
    %v1444 = vsel %vm293, %v1393, 0
    %v1447 = vsel %vm582, %v1442, 0
    %1449 = vmatpush.bf16.msra.mxu0 0
    %1450 = vmatpush.bf16.msra.mxu0 0
    %1451 = vmatpush.bf16.msra.mxu0 0
    %1452 = vmatpush.bf16.msra.mxu0 0
    %1453 = vmatpush.bf16.msra.mxu0 0
    %1454 = vmatpush.bf16.msra.mxu0 0
    %1455 = vmatpush.bf16.msra.mxu0 0
    %1456 = vmatpush.bf16.msra.mxu0 %v1447
    %1457 = vmatmul.bf16.gmra.mxu0 %v1444
    %v1458 = vpop.f32.mrf.mxu0
    %v1459 = vadd.f32 0.0, %v1458
    %v1460 = vpop.f32.mrf.mxu0
    %1461 = vdwg.mxu0
    %1462 = vrot.lane.b32.xlu0 %v1185, 64
    %v1463 = vpop.permute.xlu0 %1462
    %v1465 = vsel %vm293, %v1394, 0
    %v1468 = vsel %vm582, %v1463, 0
    %1470 = vmatpush.bf16.msra.mxu0 0
    %1471 = vmatpush.bf16.msra.mxu0 0
    %1472 = vmatpush.bf16.msra.mxu0 0
    %1473 = vmatpush.bf16.msra.mxu0 0
    %1474 = vmatpush.bf16.msra.mxu0 0
    %1475 = vmatpush.bf16.msra.mxu0 0
    %1476 = vmatpush.bf16.msra.mxu0 0
    %1477 = vmatpush.bf16.msra.mxu0 %v1468
    %1478 = vmatmul.bf16.gmra.mxu0 %v1465
    %v1479 = vpop.f32.mrf.mxu0
    %v1480 = vadd.f32 0.0, %v1479
    %v1481 = vpop.f32.mrf.mxu0
    %1482 = vdwg.mxu0
    %1483 = vrot.lane.b32.xlu0 %v1209, 64
    %v1484 = vpop.permute.xlu0 %1483
    %v1486 = vsel %vm293, %v1395, 0
    %v1489 = vsel %vm582, %v1484, 0
    %1491 = vmatpush.bf16.msra.mxu0 0
    %1492 = vmatpush.bf16.msra.mxu0 0
    %1493 = vmatpush.bf16.msra.mxu0 0
    %1494 = vmatpush.bf16.msra.mxu0 0
    %1495 = vmatpush.bf16.msra.mxu0 0
    %1496 = vmatpush.bf16.msra.mxu0 0
    %1497 = vmatpush.bf16.msra.mxu0 0
    %1498 = vmatpush.bf16.msra.mxu0 %v1489
    %1499 = vmatmul.bf16.gmra.mxu0 %v1486
    %v1500 = vpop.f32.mrf.mxu0
    %v1501 = vadd.f32 0.0, %v1500
    %v1502 = vpop.f32.mrf.mxu0
    %1503 = vdwg.mxu0
    %1504 = vrot.lane.b32.xlu0 %v1233, 64
    %v1505 = vpop.permute.xlu0 %1504
    %v1507 = vsel %vm293, %v1396, 0
    %v1510 = vsel %vm582, %v1505, 0
    %1512 = vmatpush.bf16.msra.mxu0 0
    %1513 = vmatpush.bf16.msra.mxu0 0
    %1514 = vmatpush.bf16.msra.mxu0 0
    %1515 = vmatpush.bf16.msra.mxu0 0
    %1516 = vmatpush.bf16.msra.mxu0 0
    %1517 = vmatpush.bf16.msra.mxu0 0
    %1518 = vmatpush.bf16.msra.mxu0 0
    %1519 = vmatpush.bf16.msra.mxu0 %v1510
    %1520 = vmatmul.bf16.gmra.mxu0 %v1507
    %v1521 = vpop.f32.mrf.mxu0
    %v1522 = vadd.f32 0.0, %v1521
    %v1523 = vpop.f32.mrf.mxu0
    %1524 = vdwg.mxu0
    %1525 = vrot.lane.b32.xlu0 %v1257, 64
    %v1526 = vpop.permute.xlu0 %1525
    %v1528 = vsel %vm293, %v1397, 0
    %v1531 = vsel %vm582, %v1526, 0
    %1533 = vmatpush.bf16.msra.mxu0 0
    %1534 = vmatpush.bf16.msra.mxu0 0
    %1535 = vmatpush.bf16.msra.mxu0 0
    %1536 = vmatpush.bf16.msra.mxu0 0
    %1537 = vmatpush.bf16.msra.mxu0 0
    %1538 = vmatpush.bf16.msra.mxu0 0
    %1539 = vmatpush.bf16.msra.mxu0 0
    %1540 = vmatpush.bf16.msra.mxu0 %v1531
    %1541 = vmatmul.bf16.gmra.mxu0 %v1528
    %v1542 = vpop.f32.mrf.mxu0
    %v1543 = vadd.f32 0.0, %v1542
    %v1544 = vpop.f32.mrf.mxu0
    %1545 = vdwg.mxu0
    %1546 = vrot.lane.b32.xlu0 %v1281, 64
    %v1547 = vpop.permute.xlu0 %1546
    %v1549 = vsel %vm293, %v1398, 0
    %v1552 = vsel %vm582, %v1547, 0
    %1554 = vmatpush.bf16.msra.mxu0 0
    %1555 = vmatpush.bf16.msra.mxu0 0
    %1556 = vmatpush.bf16.msra.mxu0 0
    %1557 = vmatpush.bf16.msra.mxu0 0
    %1558 = vmatpush.bf16.msra.mxu0 0
    %1559 = vmatpush.bf16.msra.mxu0 0
    %1560 = vmatpush.bf16.msra.mxu0 0
    %1561 = vmatpush.bf16.msra.mxu0 %v1552
    %1562 = vmatmul.bf16.gmra.mxu0 %v1549
    %v1563 = vpop.f32.mrf.mxu0
    %v1564 = vadd.f32 0.0, %v1563
    %v1565 = vpop.f32.mrf.mxu0
    %1566 = vdwg.mxu0
    %1568 = vrot.lane.b32.xlu0 %v1438, 8
    %v1569 = vpop.permute.xlu0 %1568
    %1572 = vrot.lane.b32.xlu0 %v1459, 16
    %v1573 = vpop.permute.xlu0 %1572
    %1576 = vrot.lane.b32.xlu0 %v1480, 24
    %v1577 = vpop.permute.xlu0 %1576
    %v1579 = vsel %vm293, %v1417, %v1569
    %v1580 = vsel %vm759, %v1579, %v1573
    %v1581 = vsel %vm761, %v1580, %v1577
    %1583 = vrot.lane.b32.xlu0 %v1522, 8
    %v1584 = vpop.permute.xlu0 %1583
    %1587 = vrot.lane.b32.xlu0 %v1543, 16
    %v1588 = vpop.permute.xlu0 %1587
    %1591 = vrot.lane.b32.xlu0 %v1564, 24
    %v1592 = vpop.permute.xlu0 %1591
    %v1594 = vsel %vm293, %v1501, %v1584
    %v1595 = vsel %vm759, %v1594, %v1588
    %v1596 = vsel %vm761, %v1595, %v1592
    %v1597 = vpack.c.bf16 %v1596, %v1581
    %s1598 = scalar_lea.vmem %s5, 16
    %v1599 = vld [vmem:[%s1598] sm:$0xf]
    %v1600 = vld [vmem:[%s1598 + $0x4] sm:$0xf]
    %v1601 = vld [vmem:[%s1598 + $0x8] sm:$0xf]
    %v1602 = vld [vmem:[%s1598 + $0xc] sm:$0xf]
    %s1603 = scalar_lea.vmem %s6, 1
    %v1604 = vld [vmem:[%s1603] sm:$0x1]
    %v1606 = vperm.slane %v1604, 0
    %v1612 = vunpack.c.l.b16 %v1599
    %v1613 = vunpack.c.l.b16 %v1600
    %v1614 = vunpack.c.l.b16 %v1601
    %v1615 = vunpack.c.l.b16 %v1602
    %v1616 = vpack.c.b16 %v1613, %v1612
    %v1617 = vpack.c.b16 %v1615, %v1614
    %v1621 = vsel %vm160, %v1597, 0
    %1623 = vmatpush.bf16.msra.mxu0 0
    %1624 = vmatpush.bf16.msra.mxu0 0
    %1625 = vmatpush.bf16.msra.mxu0 0
    %1626 = vmatpush.bf16.msra.mxu0 0
    %1627 = vmatpush.bf16.msra.mxu0 0
    %1628 = vmatpush.bf16.msra.mxu0 0
    %1629 = vmatpush.bf16.msra.mxu0 %v1617
    %1630 = vmatpush.bf16.msra.mxu0 %v1616
    %1631 = vmatmul.bf16.gmra.mxu0 %v1621
    %v1632 = vpop.f32.mrf.mxu0
    %v1633 = vadd.f32 %v1606, %v1632
    %v1634 = vpop.f32.mrf.mxu0
    %v1635 = vadd.f32 %v1606, %v1634
    %1636 = vdwg.mxu0
    %v1637 = vadd.f32 %v1633, %v1041
    %v1638 = vadd.f32 %v1635, %v1042
    %s1639 = scalar_lea.vmem [#allocation7], 1
    %v1640 = vld [vmem:[%s1639] sm:$0x1]
    %s1641 = scalar_lea.vmem %s8, 1
    %v1642 = vld [vmem:[%s1641] sm:$0x1]
    %v1643 = vsel %vm160, %v1637, 0.0
    %1644 = vadd.xlane.f32.xlu0 %v1643
    %v1645 = vpop.xlane.xlu0 %1644
    %v1646 = vsel %vm160, %v1638, 0.0
    %1647 = vadd.xlane.f32.xlu0 %v1646
    %v1648 = vpop.xlane.xlu0 %1647
    %v1649 = vmul.f32 %v1645, %v173
    %v1650 = vmul.f32 %v1648, %v173
    %v1651 = vsub.f32 %v1637, %v1649
    %v1652 = vsub.f32 %v1638, %v1650
    %v1653 = vmul.f32 %v1651, %v1651
    %v1654 = vmul.f32 %v1652, %v1652
    %v1655 = vsel %vm160, %v1653, 0.0
    %1656 = vadd.xlane.f32.xlu0 %v1655
    %v1657 = vpop.xlane.xlu0 %1656
    %v1658 = vsel %vm160, %v1654, 0.0
    %1659 = vadd.xlane.f32.xlu0 %v1658
    %v1660 = vpop.xlane.xlu0 %1659
    %v1661 = vmul.f32 %v1657, %v173
    %v1662 = vmul.f32 %v1660, %v173
    %v1663 = vadd.f32 %v1661, 1e-12
    %v1664 = vadd.f32 %v1662, 1e-12
    %v1665 = vrsqrt.pop %v1663
    %v1666 = vmul.f32 %v1665, %v1663
    %v1667 = vmul.f32 %v1666, %v1665
    %v1668 = vmul.f32 0.5, %v1667
    %v1669 = vsub.f32 1.5, %v1668
    %v1670 = vmul.f32 %v1665, %v1669
    %vm1671 = vweird.f32 %v1663
    %vm1672 = vweird.f32 %v1665
    %vm1673 = vmor %vm1671, %vm1672
    %v1674 = vsel %vm1673, %v1665, %v1670
    %v1675 = vrsqrt.pop %v1664
    %v1676 = vmul.f32 %v1675, %v1664
    %v1677 = vmul.f32 %v1676, %v1675
    %v1678 = vmul.f32 0.5, %v1677
    %v1679 = vsub.f32 1.5, %v1678
    %v1680 = vmul.f32 %v1675, %v1679
    %vm1681 = vweird.f32 %v1664
    %vm1682 = vweird.f32 %v1675
    %vm1683 = vmor %vm1681, %vm1682
    %v1684 = vsel %vm1683, %v1675, %v1680
    %v1685 = vmul.f32 %v1651, %v1674
    %v1686 = vmul.f32 %v1652, %v1684
    %v1688 = vperm.slane %v1640, 0
    %v1690 = vmul.f32 %v1685, %v1688
    %v1691 = vmul.f32 %v1686, %v1688
    %v1693 = vperm.slane %v1642, 0
    %v1695 = vadd.f32 %v1690, %v1693
    %v1696 = vadd.f32 %v1691, %v1693
    %v1697 = vpack.c.bf16 %v1696, %v1695
    %s1698 = scalar_lea.vmem %s9, 16
    %v1699 = vld [vmem:[%s1698] sm:$0xf]
    %v1700 = vld [vmem:[%s1698 + $0x4] sm:$0xf]
    %v1701 = vld [vmem:[%s1698 + $0x8] sm:$0xf]
    %v1702 = vld [vmem:[%s1698 + $0xc] sm:$0xf]
    %s1703 = scalar_lea.vmem %s10, 1
    %v1704 = vld [vmem:[%s1703] sm:$0x1]
    %v1706 = vperm.slane %v1704, 0
    %v1712 = vunpack.c.l.b16 %v1699
    %v1713 = vunpack.c.l.b16 %v1700
    %v1714 = vunpack.c.l.b16 %v1701
    %v1715 = vunpack.c.l.b16 %v1702
    %v1716 = vpack.c.b16 %v1713, %v1712
    %v1717 = vpack.c.b16 %v1715, %v1714
    %v1721 = vsel %vm160, %v1697, 0
    %1723 = vmatpush.bf16.msra.mxu0 0
    %1724 = vmatpush.bf16.msra.mxu0 0
    %1725 = vmatpush.bf16.msra.mxu0 0
    %1726 = vmatpush.bf16.msra.mxu0 0
    %1727 = vmatpush.bf16.msra.mxu0 0
    %1728 = vmatpush.bf16.msra.mxu0 0
    %1729 = vmatpush.bf16.msra.mxu0 %v1717
    %1730 = vmatpush.bf16.msra.mxu0 %v1716
    %1731 = vmatmul.bf16.gmra.mxu0 %v1721
    %v1732 = vpop.f32.mrf.mxu0
    %v1733 = vadd.f32 %v1706, %v1732
    %v1734 = vpop.f32.mrf.mxu0
    %v1735 = vadd.f32 %v1706, %v1734
    %1736 = vdwg.mxu0
    %v1737 = vmul.f32 %v1733, %v1733
    %v1738 = vmul.f32 %v1735, %v1735
    %v1739 = vmul.f32 %v1733, %v1737
    %v1740 = vmul.f32 %v1735, %v1738
    %v1741 = vmul.f32 %v1739, 0.044715
    %v1742 = vmul.f32 %v1740, 0.044715
    %v1743 = vadd.f32 %v1733, %v1741
    %v1744 = vadd.f32 %v1735, %v1742
    %v1745 = vmul.f32 %v1743, 0.7978846
    %v1746 = vmul.f32 %v1744, 0.7978846
    %v1747 = vtanh.pop %v1745
    %v1748 = vtanh.pop %v1746
    %v1749 = vadd.f32 %v1747, 1.0
    %v1750 = vadd.f32 %v1748, 1.0
    %v1751 = vmul.f32 %v1749, 0.5
    %v1752 = vmul.f32 %v1750, 0.5
    %v1753 = vmul.f32 %v1733, %v1751
    %v1754 = vmul.f32 %v1735, %v1752
    %v1755 = vpack.c.bf16 %v1754, %v1753
    %s1756 = scalar_lea.vmem %s11, 32
    %v1757 = vld [vmem:[%s1756] sm:$0xf]
    %v1758 = vld [vmem:[%s1756 + $0x4] sm:$0xf]
    %v1759 = vld [vmem:[%s1756 + $0x8] sm:$0xf]
    %v1760 = vld [vmem:[%s1756 + $0xc] sm:$0xf]
    %v1761 = vld [vmem:[%s1756 + $0x10] sm:$0xf]
    %v1762 = vld [vmem:[%s1756 + $0x14] sm:$0xf]
    %v1763 = vld [vmem:[%s1756 + $0x18] sm:$0xf]
    %v1764 = vld [vmem:[%s1756 + $0x1c] sm:$0xf]
    %s1765 = scalar_lea.vmem %s12, 1
    %v1766 = vld [vmem:[%s1765] sm:$0x1]
    %v1768 = vperm.slane %v1766, 0
    %v1778 = vunpack.c.l.b16 %v1757
    %v1779 = vunpack.c.l.b16 %v1758
    %v1780 = vunpack.c.l.b16 %v1759
    %v1781 = vunpack.c.l.b16 %v1760
    %v1782 = vunpack.c.l.b16 %v1761
    %v1783 = vunpack.c.l.b16 %v1762
    %v1784 = vunpack.c.l.b16 %v1763
    %v1785 = vunpack.c.l.b16 %v1764
    %v1786 = vpack.c.b16 %v1779, %v1778
    %v1787 = vpack.c.b16 %v1781, %v1780
    %v1788 = vpack.c.b16 %v1783, %v1782
    %v1789 = vpack.c.b16 %v1785, %v1784
    %v1795 = vsel %vm967, %v1755, 0
    %1797 = vmatpush.bf16.msra.mxu0 0
    %1798 = vmatpush.bf16.msra.mxu0 0
    %1799 = vmatpush.bf16.msra.mxu0 0
    %1800 = vmatpush.bf16.msra.mxu0 0
    %1801 = vmatpush.bf16.msra.mxu0 %v1789
    %1802 = vmatpush.bf16.msra.mxu0 %v1788
    %1803 = vmatpush.bf16.msra.mxu0 %v1787
    %1804 = vmatpush.bf16.msra.mxu0 %v1786
    %1805 = vmatmul.bf16.gmra.mxu0 %v1795
    %v1806 = vpop.f32.mrf.mxu0
    %v1807 = vadd.f32 %v1768, %v1806
    %v1808 = vpop.f32.mrf.mxu0
    %v1809 = vadd.f32 %v1768, %v1808
    %1810 = vdwg.mxu0
    %v1811 = vadd.f32 %v1807, %v1695
    %v1812 = vadd.f32 %v1809, %v1696
    %s1813 = scalar_lea.vmem [#allocation8], 1
    %v1814 = vld [vmem:[%s1813] sm:$0x1]
    %s1815 = scalar_lea.vmem %s14, 1
    %v1816 = vld [vmem:[%s1815] sm:$0x1]
    %v1817 = vsel %vm160, %v1811, 0.0
    %1818 = vadd.xlane.f32.xlu0 %v1817
    %v1819 = vpop.xlane.xlu0 %1818
    %v1820 = vsel %vm160, %v1812, 0.0
    %1821 = vadd.xlane.f32.xlu0 %v1820
    %v1822 = vpop.xlane.xlu0 %1821
    %v1823 = vmul.f32 %v1819, %v173
    %v1824 = vmul.f32 %v1822, %v173
    %v1825 = vsub.f32 %v1811, %v1823
    %v1826 = vsub.f32 %v1812, %v1824
    %v1827 = vmul.f32 %v1825, %v1825
    %v1828 = vmul.f32 %v1826, %v1826
    %v1829 = vsel %vm160, %v1827, 0.0
    %1830 = vadd.xlane.f32.xlu0 %v1829
    %v1831 = vpop.xlane.xlu0 %1830
    %v1832 = vsel %vm160, %v1828, 0.0
    %1833 = vadd.xlane.f32.xlu0 %v1832
    %v1834 = vpop.xlane.xlu0 %1833
    %v1835 = vmul.f32 %v1831, %v173
    %v1836 = vmul.f32 %v1834, %v173
    %v1837 = vadd.f32 %v1835, 1e-12
    %v1838 = vadd.f32 %v1836, 1e-12
    %v1839 = vrsqrt.pop %v1837
    %v1840 = vmul.f32 %v1839, %v1837
    %v1841 = vmul.f32 %v1840, %v1839
    %v1842 = vmul.f32 0.5, %v1841
    %v1843 = vsub.f32 1.5, %v1842
    %v1844 = vmul.f32 %v1839, %v1843
    %vm1845 = vweird.f32 %v1837
    %vm1846 = vweird.f32 %v1839
    %vm1847 = vmor %vm1845, %vm1846
    %v1848 = vsel %vm1847, %v1839, %v1844
    %v1849 = vrsqrt.pop %v1838
    %v1850 = vmul.f32 %v1849, %v1838
    %v1851 = vmul.f32 %v1850, %v1849
    %v1852 = vmul.f32 0.5, %v1851
    %v1853 = vsub.f32 1.5, %v1852
    %v1854 = vmul.f32 %v1849, %v1853
    %vm1855 = vweird.f32 %v1838
    %vm1856 = vweird.f32 %v1849
    %vm1857 = vmor %vm1855, %vm1856
    %v1858 = vsel %vm1857, %v1849, %v1854
    %v1859 = vmul.f32 %v1825, %v1848
    %v1860 = vmul.f32 %v1826, %v1858
    %v1862 = vperm.slane %v1814, 0
    %v1864 = vmul.f32 %v1859, %v1862
    %v1865 = vmul.f32 %v1860, %v1862
    %v1867 = vperm.slane %v1816, 0
    %v1869 = vadd.f32 %v1864, %v1867
    %v1870 = vadd.f32 %v1865, %v1867
    %v1872 = vrot.slane %v1870, 7
    %vm1874 = vcmask 1040384
    %v1875 = vsel %vm1874, %v1869, %v1872
    %v1876 = vpack.c.bf16 %v1875, %v1875
    %v1877 = vld [vmem:[#allocation10] sm:$0xf]
    %v1878 = vld [vmem:[#allocation10 + $0x4] sm:$0xf]
    %v1879 = vld [vmem:[#allocation10 + $0x8] sm:$0xf]
    %v1880 = vld [vmem:[#allocation10 + $0xc] sm:$0xf]
    %v1881 = vld [vmem:[%s16] sm:$0x1]
    %v1883 = vperm.slane %v1881, 0
    %v1889 = vunpack.c.l.b16 %v1877
    %v1890 = vunpack.c.l.b16 %v1878
    %v1891 = vunpack.c.l.b16 %v1879
    %v1892 = vunpack.c.l.b16 %v1880
    %v1893 = vpack.c.b16 %v1890, %v1889
    %v1894 = vpack.c.b16 %v1892, %v1891
    %v1898 = vsel %vm160, %v1876, 0
    %1900 = vmatpush.bf16.msra.mxu0 0
    %1901 = vmatpush.bf16.msra.mxu0 0
    %1902 = vmatpush.bf16.msra.mxu0 0
    %1903 = vmatpush.bf16.msra.mxu0 0
    %1904 = vmatpush.bf16.msra.mxu0 0
    %1905 = vmatpush.bf16.msra.mxu0 0
    %1906 = vmatpush.bf16.msra.mxu0 %v1894
    %1907 = vmatpush.bf16.msra.mxu0 %v1893
    %1908 = vmatmul.bf16.gmra.mxu0 %v1898
    %v1909 = vpop.f32.mrf.mxu0
    %v1910 = vadd.f32 %v1883, %v1909
    %v1911 = vpop.f32.mrf.mxu0
    %1912 = vdwg.mxu0
    %v1913 = vtanh.pop %v1910
    %v1914 = vpack.c.bf16 %v1913, %v1913
    %v1915 = vld [vmem:[#allocation11] sm:$0xf]
    %v1916 = vld [vmem:[#allocation11 + $0x4] sm:$0xf]
    %v1917 = vld [vmem:[#allocation11 + $0x8] sm:$0xf]
    %v1918 = vld [vmem:[#allocation11 + $0xc] sm:$0xf]
    %v1919 = vld [vmem:[%s18] sm:$0x1]
    %v1921 = vperm.slane %v1919, 0
    %v1927 = vunpack.c.l.b16 %v1915
    %v1928 = vunpack.c.l.b16 %v1916
    %v1929 = vunpack.c.l.b16 %v1917
    %v1930 = vunpack.c.l.b16 %v1918
    %v1931 = vpack.c.b16 %v1928, %v1927
    %v1932 = vpack.c.b16 %v1930, %v1929
    %v1936 = vsel %vm160, %v1914, 0
    %1938 = vmatpush.bf16.msra.mxu0 0
    %1939 = vmatpush.bf16.msra.mxu0 0
    %1940 = vmatpush.bf16.msra.mxu0 0
    %1941 = vmatpush.bf16.msra.mxu0 0
    %1942 = vmatpush.bf16.msra.mxu0 0
    %1943 = vmatpush.bf16.msra.mxu0 0
    %1944 = vmatpush.bf16.msra.mxu0 %v1932
    %1945 = vmatpush.bf16.msra.mxu0 %v1931
    %1946 = vmatmul.bf16.gmra.mxu0 %v1936
    %v1947 = vpop.f32.mrf.mxu0
    %v1948 = vadd.f32 %v1921, %v1947
    %v1949 = vpop.f32.mrf.mxu0
    %1950 = vdwg.mxu0
    %1951 = vst [vmem:[#allocation13] sm:$0x3] %v1948
    // Predicated region
    $region102: #{tpu_custom_call.1} parent=1 // pred_check
      _
    $region103: #{tpu_custom_call.1} parent=1 // pred_check_branch
      %1953 = sbr.rel (0) target = $region105
    $region104: #{tpu_custom_call.1} parent=1 // pred_region
      %1955 = vsyncadd [#allocation4], 0
      %s1957 = sshll.u32 [#allocation13], 4
      %s1958 = int_to_ptr.vmem [resolvable:$true] %s1957
      %s1959 = sshll.u32 %s19, 4
      %s1960 = int_to_ptr.hbm [resolvable:$true] %s1959
      %1962 = dma.vmem_to_hbm [thread:$0]  %s1958, 32, %s1960, [#allocation4]
    $region105: #{tpu_custom_call.1} parent=1 // pred_fallthru
      _
    // Predicated region
    $region106: #{tpu_custom_call.1} parent=1 // pred_check
      _
    $region107: #{tpu_custom_call.1} parent=1 // pred_check_branch
      %1964 = sbr.rel (0) target = $region109
    $region108: #{tpu_custom_call.1} parent=1 // pred_region
      %1966 = dma.done [#allocation4], 32
    $region109: #{tpu_custom_call.1} parent=1 // pred_fallthru
      _
    %1967 = vsyncpa [#allocation3], 1
    %1968 = vsyncpa [#allocation6], 1
    %1969 = vsyncpa [#allocation9], 1
    %1970 = vsyncpa [#allocation12], 1
    %1971 = vsyncpa [#allocation4], 1

</llo_original>
